<compile_context>
chip_gen: v5e
topology: v5e:2x2
jax: 0.10.0
libtpu: 0.0.40
codegen_flags: <defaults>
</compile_context>

<pallas_src>
import functools

import jax
import jax.numpy as jnp
from jax.experimental import pallas as pl
from jax.experimental.pallas import tpu as pltpu


# ----------------------------- in-kernel math ------------------------------

def _erf(x):
    # Abramowitz & Stegun 7.1.26 polynomial erf (max abs err ~1.5e-7), built
    # from exp (EUP-lowerable). Matches torch.nn.GELU (exact erf) to ~1e-7.
    a1, a2, a3, a4, a5 = 0.254829592, -0.284496736, 1.421413741, -1.453152027, 1.061405429
    p = 0.3275911
    ax = jnp.abs(x)
    t = 1.0 / (1.0 + p * ax)
    poly = ((((a5 * t + a4) * t + a3) * t + a2) * t + a1) * t
    y = 1.0 - poly * jnp.exp(-ax * ax)
    return jnp.where(x >= 0.0, y, -y)


def _gelu(x):
    return 0.5 * x * (1.0 + _erf(x * 0.7071067811865476))


def _layernorm_channels(x, gamma, beta, eps=1e-5):
    # x: (C, TN) — normalize every position (lane) over its channel column,
    # exactly like nn.LayerNorm(C) applied to the (B, N, C) permuted tensor.
    mu = jnp.mean(x, axis=0, keepdims=True)
    xc = x - mu
    var = jnp.mean(xc * xc, axis=0, keepdims=True)
    inv = jax.lax.rsqrt(var + eps)
    return xc * inv * gamma + beta


def _embedding_block_kernel(x_ref, w1_ref, b1_ref, g1_ref, be1_ref,
                            w2_ref, b2_ref, g2_ref, be2_ref, o_ref):
    x = x_ref[...].astype(jnp.float32)                               # (K, TN)
    # conv1 (im2col matmul) + GELU + LayerNorm over channels
    h = jnp.dot(w1_ref[...], x, preferred_element_type=jnp.float32) + b1_ref[...]
    h = _gelu(h)
    h = _layernorm_channels(h, g1_ref[...], be1_ref[...])            # (C1, TN)
    # conv2 (1x1x1 conv == per-position matmul) + GELU + LayerNorm
    h = jnp.dot(w2_ref[...], h, preferred_element_type=jnp.float32) + b2_ref[...]
    h = _gelu(h)
    h = _layernorm_channels(h, g2_ref[...], be2_ref[...])            # (C2, TN)
    o_ref[...] = h.astype(o_ref.dtype)


# ------------------------------ host wrapper --------------------------------

_TN_MAX = 512  # positions per grid step (lane axis); multiple of 128


def _round_up(v, m):
    return (v + m - 1) // m * m


@functools.partial(jax.jit, static_argnames=("kernel", "padding", "stride", "tn"))
def _block_forward(x, w1, b1, g1, be1, w2, b2, g2, be2,
                   *, kernel, padding, stride, tn):
    b, c_in, d, h, w = x.shape
    c1 = w1.shape[0]
    c2 = w2.shape[0]
    do = (d + 2 * padding - kernel) // stride + 1
    ho = (h + 2 * padding - kernel) // stride + 1
    wo = (w + 2 * padding - kernel) // stride + 1
    n = b * do * ho * wo
    k_dim = c_in * kernel ** 3

    # ---- im2col, producing patches^T of shape (K, N); K ordered (C, kd, kh, kw)
    if padding == 0 and stride == kernel:
        # non-overlapping patches: pure reshape/transpose, no data blowup
        xr = x.reshape(b, c_in, do, kernel, ho, kernel, wo, kernel)
        xr = xr.transpose(1, 3, 5, 7, 0, 2, 4, 6)   # (C, kd, kh, kw, B, Do, Ho, Wo)
        patches_t = xr.reshape(k_dim, n)
    else:
        # overlapping k=3, pad=1, stride=1 block: exact patch extraction
        p = jax.lax.conv_general_dilated_patches(
            x, filter_shape=(kernel,) * 3, window_strides=(stride,) * 3,
            padding=((padding, padding),) * 3,
            precision=jax.lax.Precision.HIGHEST)
        # p: (B, C*k^3, Do, Ho, Wo), feature dim ordered (C, kd, kh, kw)
        patches_t = p.reshape(b, k_dim, do * ho * wo).transpose(1, 0, 2)
        patches_t = patches_t.reshape(k_dim, n)

    n_pad = _round_up(n, tn)
    if n_pad != n:                         # only block3 (16 -> 128 positions)
        patches_t = jnp.pad(patches_t, ((0, 0), (0, n_pad - n)))

    # matmul-form weights: (C1, K) and (C2, C1); K matches PyTorch Conv3d
    # weight flattening order (C_in, kd, kh, kw).
    w1t = w1.reshape(c1, k_dim)
    w2t = w2.reshape(c2, c1)

    full = lambda i: (0, 0)
    out = pl.pallas_call(
        _embedding_block_kernel,
        out_shape=jax.ShapeDtypeStruct((c2, n_pad), jnp.float32),
        grid_spec=pltpu.PrefetchScalarGridSpec(
            num_scalar_prefetch=0,
            grid=(n_pad // tn,),
            in_specs=[
                pl.BlockSpec((k_dim, tn), lambda i: (0, i)),
                pl.BlockSpec((c1, k_dim), full),
                pl.BlockSpec((c1, 1), full),
                pl.BlockSpec((c1, 1), full),
                pl.BlockSpec((c1, 1), full),
                pl.BlockSpec((c2, c1), full),
                pl.BlockSpec((c2, 1), full),
                pl.BlockSpec((c2, 1), full),
                pl.BlockSpec((c2, 1), full),
            ],
            out_specs=pl.BlockSpec((c2, tn), lambda i: (0, i)),
        ),
        compiler_params=pltpu.CompilerParams(
            dimension_semantics=("parallel",)),
    )(patches_t, w1t,
      b1.reshape(c1, 1), g1.reshape(c1, 1), be1.reshape(c1, 1),
      w2t, b2.reshape(c2, 1), g2.reshape(c2, 1), be2.reshape(c2, 1))

    out = out[:, :n]                                               # (C2, N)
    return out.reshape(c2, b, do, ho, wo).transpose(1, 0, 2, 3, 4)  # NCDHW


# --------------------------- parameters / module ----------------------------

def _make_block_params(key, in_c, out_c, kernel, padding, stride):
    c1 = out_c // 2
    c2 = out_c
    kk = jax.random.split(key, 4)
    fan1 = float(in_c * kernel ** 3)
    return {
        "w1": (jax.random.normal(kk[0], (c1, in_c, kernel, kernel, kernel),
                                 jnp.float32) * (1.0 / fan1 ** 0.5)),
        "b1": jax.random.normal(kk[1], (c1,), jnp.float32) * 0.01,
        "g1": jnp.ones((c1,), jnp.float32),
        "be1": jnp.zeros((c1,), jnp.float32),
        "w2": (jax.random.normal(kk[2], (c2, c1, 1, 1, 1), jnp.float32)
               * (1.0 / float(c1) ** 0.5)),
        "b2": jax.random.normal(kk[3], (c2,), jnp.float32) * 0.01,
        "g2": jnp.ones((c2,), jnp.float32),
        "be2": jnp.zeros((c2,), jnp.float32),
        "kernel": kernel, "padding": padding, "stride": stride,
    }


def embedding_block_forward(x, p):
    b, _, d, h, w = x.shape
    k, pad, st = p["kernel"], p["padding"], p["stride"]
    do = (d + 2 * pad - k) // st + 1
    ho = (h + 2 * pad - k) // st + 1
    wo = (w + 2 * pad - k) // st + 1
    n = b * do * ho * wo
    tn = min(_TN_MAX, _round_up(n, 128))   # per-block row tile (lane-dense)
    return _block_forward(x, p["w1"], p["b1"], p["g1"], p["be1"],
                          p["w2"], p["b2"], p["g2"], p["be2"],
                          kernel=k, padding=pad, stride=st, tn=tn)


def encoder_init(key, in_chns, feature_chns):
    assert len(feature_chns) == 4
    ks = jax.random.split(key, 4)
    cfg = [(3, 1, 1), (2, 0, 2), (4, 0, 4), (8, 0, 8)]  # (kernel, pad, stride)
    return [_make_block_params(ks[i], in_chns, feature_chns[i], *cfg[i])
            for i in range(4)]


def encoder_forward(x, params_list):
    return [embedding_block_forward(x, p) for p in params_list]


# --------------------- pure-XLA reference (for checking) --------------------

def _ref_layernorm_ch(x, g, b, eps=1e-5):
    mu = jnp.mean(x, axis=1, keepdims=True)
    var = jnp.mean((x - mu) ** 2, axis=1, keepdims=True)
    xn = (x - mu) * jax.lax.rsqrt(var + eps)
    return xn * g.reshape(1, -1, 1, 1, 1) + b.reshape(1, -1, 1, 1, 1)


def _ref_block(x, p):
    dn = ("NCDHW", "OIDHW", "NCDHW")
    st, pad = p["stride"], p["padding"]
    hi = jax.lax.conv_general_dilated(
        x, p["w1"], (st,) * 3, ((pad, pad),) * 3, dimension_numbers=dn,
        precision=jax.lax.Precision.HIGHEST)
    hi = hi + p["b1"].reshape(1, -1, 1, 1, 1)
    hi = jax.nn.gelu(hi, approximate=False)
    hi = _ref_layernorm_ch(hi, p["g1"], p["be1"])
    hi = jax.lax.conv_general_dilated(
        hi, p["w2"], (1, 1, 1), ((0, 0),) * 3, dimension_numbers=dn,
        precision=jax.lax.Precision.HIGHEST)
    hi = hi + p["b2"].reshape(1, -1, 1, 1, 1)
    hi = jax.nn.gelu(hi, approximate=False)
    hi = _ref_layernorm_ch(hi, p["g2"], p["be2"])
    return hi


# --------------------------------- main -------------------------------------

if __name__ == "__main__":
    key = jax.random.PRNGKey(0)
    k_param, k_x = jax.random.split(key)

    B, in_chns = 2, 2
    D = H = W = 16                      # must be divisible by 8 for down3
    feature_chns = [8, 16, 32, 64]

    params_list = encoder_init(k_param, in_chns, feature_chns)
    x = jax.random.normal(k_x, (B, in_chns, D, H, W), jnp.float32)

    outs = encoder_forward(x, params_list)
    outs = jax.block_until_ready(outs)

    expected = [
        (B, 8, 16, 16, 16),
        (B, 16, 8, 8, 8),
        (B, 32, 4, 4, 4),
        (B, 64, 2, 2, 2),
    ]
    for o, e in zip(outs, expected):
        assert o.shape == e, (o.shape, e)
        assert bool(jnp.all(jnp.isfinite(o)))

    # numerical sanity check against a pure-XLA reference of the same forward
    for o, p in zip(outs, params_list):
        ref = _ref_block(x, p)
        err = float(jnp.max(jnp.abs(o - ref)))
        assert err < 5e-2, ("mismatch vs reference", err)

    print("KERNEL_OK")
</pallas_src>

<mosaic_0001>
module attributes {stable_mosaic.version = 11 : i64} {
  func.func @_embedding_block_kernel(%arg0: i32, %arg1: memref<54x512xf32, #tpu.memory_space<vmem>>, %arg2: memref<4x54xf32, #tpu.memory_space<vmem>>, %arg3: memref<4x1xf32, #tpu.memory_space<vmem>>, %arg4: memref<4x1xf32, #tpu.memory_space<vmem>>, %arg5: memref<4x1xf32, #tpu.memory_space<vmem>>, %arg6: memref<8x4xf32, #tpu.memory_space<vmem>>, %arg7: memref<8x1xf32, #tpu.memory_space<vmem>>, %arg8: memref<8x1xf32, #tpu.memory_space<vmem>>, %arg9: memref<8x1xf32, #tpu.memory_space<vmem>>, %arg10: memref<8x512xf32, #tpu.memory_space<vmem>>) attributes {dimension_semantics = [#tpu.dimension_semantics<parallel>], iteration_bounds = array<i64: 16>, scalar_prefetch = 0 : i64, scratch_operands = 0 : i64, tpu.core_type = #tpu.core_type<tc>, window_params = [{transform_indices = @transform_0, window_bounds = array<i64: 54, 512>}, {pipeline_mode = #tpu.pipeline_mode<synchronous>, transform_indices = @transform_1, window_bounds = array<i64: 4, 54>}, {pipeline_mode = #tpu.pipeline_mode<synchronous>, transform_indices = @transform_2, window_bounds = array<i64: 4, 1>}, {pipeline_mode = #tpu.pipeline_mode<synchronous>, transform_indices = @transform_3, window_bounds = array<i64: 4, 1>}, {pipeline_mode = #tpu.pipeline_mode<synchronous>, transform_indices = @transform_4, window_bounds = array<i64: 4, 1>}, {pipeline_mode = #tpu.pipeline_mode<synchronous>, transform_indices = @transform_5, window_bounds = array<i64: 8, 4>}, {pipeline_mode = #tpu.pipeline_mode<synchronous>, transform_indices = @transform_6, window_bounds = array<i64: 8, 1>}, {pipeline_mode = #tpu.pipeline_mode<synchronous>, transform_indices = @transform_7, window_bounds = array<i64: 8, 1>}, {pipeline_mode = #tpu.pipeline_mode<synchronous>, transform_indices = @transform_8, window_bounds = array<i64: 8, 1>}, {transform_indices = @transform_9, window_bounds = array<i64: 8, 512>}]} {
    %c0 = arith.constant 0 : index
    %c0_0 = arith.constant 0 : index
    %0 = vector.load %arg1[%c0, %c0_0] : memref<54x512xf32, #tpu.memory_space<vmem>>, vector<54x512xf32>
    %c0_1 = arith.constant 0 : index
    %c0_2 = arith.constant 0 : index
    %1 = vector.load %arg2[%c0_1, %c0_2] : memref<4x54xf32, #tpu.memory_space<vmem>>, vector<4x54xf32>
    %cst = arith.constant dense<0.000000e+00> : vector<4x512xf32>
    %2 = tpu.matmul %1, %0, %cst {dimension_numbers = #tpu.dot_dimension_numbers<[1], [0], [0], [1], [0, 0, 1, 1], [], []>} : vector<4x54xf32>, vector<54x512xf32>, vector<4x512xf32> -> vector<4x512xf32>
    %c0_3 = arith.constant 0 : index
    %c0_4 = arith.constant 0 : index
    %3 = vector.load %arg3[%c0_3, %c0_4] : memref<4x1xf32, #tpu.memory_space<vmem>>, vector<4x1xf32>
    %4 = vector.broadcast %3 : vector<4x1xf32> to vector<4x512xf32>
    %5 = arith.addf %2, %4 : vector<4x512xf32>
    %cst_5 = arith.constant 5.000000e-01 : f32
    %6 = vector.broadcast %cst_5 : f32 to vector<4x512xf32>
    %7 = arith.mulf %6, %5 : vector<4x512xf32>
    %cst_6 = arith.constant 0.707106769 : f32
    %8 = vector.broadcast %cst_6 : f32 to vector<4x512xf32>
    %9 = arith.mulf %5, %8 : vector<4x512xf32>
    %10 = math.absf %9 : vector<4x512xf32>
    %cst_7 = arith.constant 0.327591091 : f32
    %11 = vector.broadcast %cst_7 : f32 to vector<4x512xf32>
    %12 = arith.mulf %11, %10 : vector<4x512xf32>
    %cst_8 = arith.constant 1.000000e+00 : f32
    %13 = vector.broadcast %cst_8 : f32 to vector<4x512xf32>
    %14 = arith.addf %13, %12 : vector<4x512xf32>
    %cst_9 = arith.constant 1.000000e+00 : f32
    %15 = vector.broadcast %cst_9 : f32 to vector<4x512xf32>
    %16 = arith.divf %15, %14 : vector<4x512xf32>
    %cst_10 = arith.constant 1.06140542 : f32
    %17 = vector.broadcast %cst_10 : f32 to vector<4x512xf32>
    %18 = arith.mulf %17, %16 : vector<4x512xf32>
    %cst_11 = arith.constant -1.45315206 : f32
    %19 = vector.broadcast %cst_11 : f32 to vector<4x512xf32>
    %20 = arith.addf %18, %19 : vector<4x512xf32>
    %21 = arith.mulf %20, %16 : vector<4x512xf32>
    %cst_12 = arith.constant 1.42141378 : f32
    %22 = vector.broadcast %cst_12 : f32 to vector<4x512xf32>
    %23 = arith.addf %21, %22 : vector<4x512xf32>
    %24 = arith.mulf %23, %16 : vector<4x512xf32>
    %cst_13 = arith.constant -0.284496725 : f32
    %25 = vector.broadcast %cst_13 : f32 to vector<4x512xf32>
    %26 = arith.addf %24, %25 : vector<4x512xf32>
    %27 = arith.mulf %26, %16 : vector<4x512xf32>
    %cst_14 = arith.constant 0.254829586 : f32
    %28 = vector.broadcast %cst_14 : f32 to vector<4x512xf32>
    %29 = arith.addf %27, %28 : vector<4x512xf32>
    %30 = arith.mulf %29, %16 : vector<4x512xf32>
    %cst_15 = arith.constant 0.000000e+00 : f32
    %31 = vector.broadcast %cst_15 : f32 to vector<4x512xf32>
    %32 = arith.subf %31, %10 : vector<4x512xf32>
    %33 = arith.mulf %32, %10 : vector<4x512xf32>
    %34 = math.exp %33 : vector<4x512xf32>
    %35 = arith.mulf %30, %34 : vector<4x512xf32>
    %cst_16 = arith.constant 1.000000e+00 : f32
    %36 = vector.broadcast %cst_16 : f32 to vector<4x512xf32>
    %37 = arith.subf %36, %35 : vector<4x512xf32>
    %cst_17 = arith.constant 0.000000e+00 : f32
    %38 = vector.broadcast %cst_17 : f32 to vector<4x512xf32>
    %39 = arith.cmpf oge, %9, %38 : vector<4x512xf32>
    %cst_18 = arith.constant 0.000000e+00 : f32
    %40 = vector.broadcast %cst_18 : f32 to vector<4x512xf32>
    %41 = arith.subf %40, %37 : vector<4x512xf32>
    %42 = arith.select %39, %37, %41 : vector<4x512xi1>, vector<4x512xf32>
    %cst_19 = arith.constant 1.000000e+00 : f32
    %43 = vector.broadcast %cst_19 : f32 to vector<4x512xf32>
    %44 = arith.addf %43, %42 : vector<4x512xf32>
    %45 = arith.mulf %7, %44 : vector<4x512xf32>
    %c0_20 = arith.constant 0 : index
    %c0_21 = arith.constant 0 : index
    %46 = vector.load %arg4[%c0_20, %c0_21] : memref<4x1xf32, #tpu.memory_space<vmem>>, vector<4x1xf32>
    %c0_22 = arith.constant 0 : index
    %c0_23 = arith.constant 0 : index
    %47 = vector.load %arg5[%c0_22, %c0_23] : memref<4x1xf32, #tpu.memory_space<vmem>>, vector<4x1xf32>
    %cst_24 = arith.constant dense<0.000000e+00> : vector<512xf32>
    %48 = vector.multi_reduction <add>, %45, %cst_24 [0] : vector<4x512xf32> to vector<512xf32>
    %49 = vector.shape_cast %48 : vector<512xf32> to vector<1x512xf32>
    %cst_25 = arith.constant 4.000000e+00 : f32
    %50 = vector.broadcast %cst_25 : f32 to vector<1x512xf32>
    %51 = arith.divf %49, %50 : vector<1x512xf32>
    %52 = vector.broadcast %51 : vector<1x512xf32> to vector<4x512xf32>
    %53 = arith.subf %45, %52 : vector<4x512xf32>
    %54 = arith.mulf %53, %53 : vector<4x512xf32>
    %cst_26 = arith.constant dense<0.000000e+00> : vector<512xf32>
    %55 = vector.multi_reduction <add>, %54, %cst_26 [0] : vector<4x512xf32> to vector<512xf32>
    %56 = vector.shape_cast %55 : vector<512xf32> to vector<1x512xf32>
    %cst_27 = arith.constant 4.000000e+00 : f32
    %57 = vector.broadcast %cst_27 : f32 to vector<1x512xf32>
    %58 = arith.divf %56, %57 : vector<1x512xf32>
    %cst_28 = arith.constant 9.99999974E-6 : f32
    %59 = vector.broadcast %cst_28 : f32 to vector<1x512xf32>
    %60 = arith.addf %58, %59 : vector<1x512xf32>
    %61 = math.rsqrt %60 : vector<1x512xf32>
    %62 = vector.broadcast %61 : vector<1x512xf32> to vector<4x512xf32>
    %63 = arith.mulf %53, %62 : vector<4x512xf32>
    %64 = vector.broadcast %46 : vector<4x1xf32> to vector<4x512xf32>
    %65 = arith.mulf %63, %64 : vector<4x512xf32>
    %66 = vector.broadcast %47 : vector<4x1xf32> to vector<4x512xf32>
    %67 = arith.addf %65, %66 : vector<4x512xf32>
    %c0_29 = arith.constant 0 : index
    %c0_30 = arith.constant 0 : index
    %68 = vector.load %arg6[%c0_29, %c0_30] : memref<8x4xf32, #tpu.memory_space<vmem>>, vector<8x4xf32>
    %cst_31 = arith.constant dense<0.000000e+00> : vector<8x512xf32>
    %69 = tpu.matmul %68, %67, %cst_31 {dimension_numbers = #tpu.dot_dimension_numbers<[1], [0], [0], [1], [0, 0, 1, 1], [], []>} : vector<8x4xf32>, vector<4x512xf32>, vector<8x512xf32> -> vector<8x512xf32>
    %c0_32 = arith.constant 0 : index
    %c0_33 = arith.constant 0 : index
    %70 = vector.load %arg7[%c0_32, %c0_33] : memref<8x1xf32, #tpu.memory_space<vmem>>, vector<8x1xf32>
    %71 = vector.broadcast %70 : vector<8x1xf32> to vector<8x512xf32>
    %72 = arith.addf %69, %71 : vector<8x512xf32>
    %cst_34 = arith.constant 5.000000e-01 : f32
    %73 = vector.broadcast %cst_34 : f32 to vector<8x512xf32>
    %74 = arith.mulf %73, %72 : vector<8x512xf32>
    %cst_35 = arith.constant 0.707106769 : f32
    %75 = vector.broadcast %cst_35 : f32 to vector<8x512xf32>
    %76 = arith.mulf %72, %75 : vector<8x512xf32>
    %77 = math.absf %76 : vector<8x512xf32>
    %cst_36 = arith.constant 0.327591091 : f32
    %78 = vector.broadcast %cst_36 : f32 to vector<8x512xf32>
    %79 = arith.mulf %78, %77 : vector<8x512xf32>
    %cst_37 = arith.constant 1.000000e+00 : f32
    %80 = vector.broadcast %cst_37 : f32 to vector<8x512xf32>
    %81 = arith.addf %80, %79 : vector<8x512xf32>
    %cst_38 = arith.constant 1.000000e+00 : f32
    %82 = vector.broadcast %cst_38 : f32 to vector<8x512xf32>
    %83 = arith.divf %82, %81 : vector<8x512xf32>
    %cst_39 = arith.constant 1.06140542 : f32
    %84 = vector.broadcast %cst_39 : f32 to vector<8x512xf32>
    %85 = arith.mulf %84, %83 : vector<8x512xf32>
    %cst_40 = arith.constant -1.45315206 : f32
    %86 = vector.broadcast %cst_40 : f32 to vector<8x512xf32>
    %87 = arith.addf %85, %86 : vector<8x512xf32>
    %88 = arith.mulf %87, %83 : vector<8x512xf32>
    %cst_41 = arith.constant 1.42141378 : f32
    %89 = vector.broadcast %cst_41 : f32 to vector<8x512xf32>
    %90 = arith.addf %88, %89 : vector<8x512xf32>
    %91 = arith.mulf %90, %83 : vector<8x512xf32>
    %cst_42 = arith.constant -0.284496725 : f32
    %92 = vector.broadcast %cst_42 : f32 to vector<8x512xf32>
    %93 = arith.addf %91, %92 : vector<8x512xf32>
    %94 = arith.mulf %93, %83 : vector<8x512xf32>
    %cst_43 = arith.constant 0.254829586 : f32
    %95 = vector.broadcast %cst_43 : f32 to vector<8x512xf32>
    %96 = arith.addf %94, %95 : vector<8x512xf32>
    %97 = arith.mulf %96, %83 : vector<8x512xf32>
    %cst_44 = arith.constant 0.000000e+00 : f32
    %98 = vector.broadcast %cst_44 : f32 to vector<8x512xf32>
    %99 = arith.subf %98, %77 : vector<8x512xf32>
    %100 = arith.mulf %99, %77 : vector<8x512xf32>
    %101 = math.exp %100 : vector<8x512xf32>
    %102 = arith.mulf %97, %101 : vector<8x512xf32>
    %cst_45 = arith.constant 1.000000e+00 : f32
    %103 = vector.broadcast %cst_45 : f32 to vector<8x512xf32>
    %104 = arith.subf %103, %102 : vector<8x512xf32>
    %cst_46 = arith.constant 0.000000e+00 : f32
    %105 = vector.broadcast %cst_46 : f32 to vector<8x512xf32>
    %106 = arith.cmpf oge, %76, %105 : vector<8x512xf32>
    %cst_47 = arith.constant 0.000000e+00 : f32
    %107 = vector.broadcast %cst_47 : f32 to vector<8x512xf32>
    %108 = arith.subf %107, %104 : vector<8x512xf32>
    %109 = arith.select %106, %104, %108 : vector<8x512xi1>, vector<8x512xf32>
    %cst_48 = arith.constant 1.000000e+00 : f32
    %110 = vector.broadcast %cst_48 : f32 to vector<8x512xf32>
    %111 = arith.addf %110, %109 : vector<8x512xf32>
    %112 = arith.mulf %74, %111 : vector<8x512xf32>
    %c0_49 = arith.constant 0 : index
    %c0_50 = arith.constant 0 : index
    %113 = vector.load %arg8[%c0_49, %c0_50] : memref<8x1xf32, #tpu.memory_space<vmem>>, vector<8x1xf32>
    %c0_51 = arith.constant 0 : index
    %c0_52 = arith.constant 0 : index
    %114 = vector.load %arg9[%c0_51, %c0_52] : memref<8x1xf32, #tpu.memory_space<vmem>>, vector<8x1xf32>
    %cst_53 = arith.constant dense<0.000000e+00> : vector<512xf32>
    %115 = vector.multi_reduction <add>, %112, %cst_53 [0] : vector<8x512xf32> to vector<512xf32>
    %116 = vector.shape_cast %115 : vector<512xf32> to vector<1x512xf32>
    %cst_54 = arith.constant 8.000000e+00 : f32
    %117 = vector.broadcast %cst_54 : f32 to vector<1x512xf32>
    %118 = arith.divf %116, %117 : vector<1x512xf32>
    %119 = vector.broadcast %118 : vector<1x512xf32> to vector<8x512xf32>
    %120 = arith.subf %112, %119 : vector<8x512xf32>
    %121 = arith.mulf %120, %120 : vector<8x512xf32>
    %cst_55 = arith.constant dense<0.000000e+00> : vector<512xf32>
    %122 = vector.multi_reduction <add>, %121, %cst_55 [0] : vector<8x512xf32> to vector<512xf32>
    %123 = vector.shape_cast %122 : vector<512xf32> to vector<1x512xf32>
    %cst_56 = arith.constant 8.000000e+00 : f32
    %124 = vector.broadcast %cst_56 : f32 to vector<1x512xf32>
    %125 = arith.divf %123, %124 : vector<1x512xf32>
    %cst_57 = arith.constant 9.99999974E-6 : f32
    %126 = vector.broadcast %cst_57 : f32 to vector<1x512xf32>
    %127 = arith.addf %125, %126 : vector<1x512xf32>
    %128 = math.rsqrt %127 : vector<1x512xf32>
    %129 = vector.broadcast %128 : vector<1x512xf32> to vector<8x512xf32>
    %130 = arith.mulf %120, %129 : vector<8x512xf32>
    %131 = vector.broadcast %113 : vector<8x1xf32> to vector<8x512xf32>
    %132 = arith.mulf %130, %131 : vector<8x512xf32>
    %133 = vector.broadcast %114 : vector<8x1xf32> to vector<8x512xf32>
    %134 = arith.addf %132, %133 : vector<8x512xf32>
    %c0_58 = arith.constant 0 : index
    %c0_59 = arith.constant 0 : index
    %135 = vector.load %arg10[%c0_58, %c0_59] : memref<8x512xf32, #tpu.memory_space<vmem>>, vector<8x512xf32>
    tpu.vector_store %arg10[%c0_58, %c0_59], %134 {strides = array<i32>} : memref<8x512xf32, #tpu.memory_space<vmem>>, vector<8x512xf32>,
    return
  }
  func.func @transform_0(%arg0: i32) -> (i32, i32) {
    %c0_i32 = arith.constant 0 : i32
    %c0_i32_0 = arith.constant 0 : i32
    return %c0_i32, %arg0 : i32, i32
  }
  func.func @transform_1(%arg0: i32) -> (i32, i32) {
    %c0_i32 = arith.constant 0 : i32
    %c0_i32_0 = arith.constant 0 : i32
    %c0_i32_1 = arith.constant 0 : i32
    return %c0_i32, %c0_i32_0 : i32, i32
  }
  func.func @transform_2(%arg0: i32) -> (i32, i32) {
    %c0_i32 = arith.constant 0 : i32
    %c0_i32_0 = arith.constant 0 : i32
    %c0_i32_1 = arith.constant 0 : i32
    return %c0_i32, %c0_i32_0 : i32, i32
  }
  func.func @transform_3(%arg0: i32) -> (i32, i32) {
    %c0_i32 = arith.constant 0 : i32
    %c0_i32_0 = arith.constant 0 : i32
    %c0_i32_1 = arith.constant 0 : i32
    return %c0_i32, %c0_i32_0 : i32, i32
  }
  func.func @transform_4(%arg0: i32) -> (i32, i32) {
    %c0_i32 = arith.constant 0 : i32
    %c0_i32_0 = arith.constant 0 : i32
    %c0_i32_1 = arith.constant 0 : i32
    return %c0_i32, %c0_i32_0 : i32, i32
  }
  func.func @transform_5(%arg0: i32) -> (i32, i32) {
    %c0_i32 = arith.constant 0 : i32
    %c0_i32_0 = arith.constant 0 : i32
    %c0_i32_1 = arith.constant 0 : i32
    return %c0_i32, %c0_i32_0 : i32, i32
  }
  func.func @transform_6(%arg0: i32) -> (i32, i32) {
    %c0_i32 = arith.constant 0 : i32
    %c0_i32_0 = arith.constant 0 : i32
    %c0_i32_1 = arith.constant 0 : i32
    return %c0_i32, %c0_i32_0 : i32, i32
  }
  func.func @transform_7(%arg0: i32) -> (i32, i32) {
    %c0_i32 = arith.constant 0 : i32
    %c0_i32_0 = arith.constant 0 : i32
    %c0_i32_1 = arith.constant 0 : i32
    return %c0_i32, %c0_i32_0 : i32, i32
  }
  func.func @transform_8(%arg0: i32) -> (i32, i32) {
    %c0_i32 = arith.constant 0 : i32
    %c0_i32_0 = arith.constant 0 : i32
    %c0_i32_1 = arith.constant 0 : i32
    return %c0_i32, %c0_i32_0 : i32, i32
  }
  func.func @transform_9(%arg0: i32) -> (i32, i32) {
    %c0_i32 = arith.constant 0 : i32
    %c0_i32_0 = arith.constant 0 : i32
    return %c0_i32, %arg0 : i32, i32
  }
}

</mosaic_0001>

<llo_original>
// kernel: _block_forward.1
$region0: #{_block_forward.1}
  #allocation0 [shape = 'u32[]', space=smem, size = 0x4, offset = 0x4, fixed_abs, tag = 'smem constant byte address 0x4 - core index']
  #allocation1 [shape = 'u32[72,128]{1,0:T(1,128)}', space=vmem, size = 0x9000, scoped, tag = 'internal scratch']
  %s0 = inlined_call_operand.vmem [shape: f32[54,8192], index: 0, kind: input, shape index: {}]
  %s1 = inlined_call_operand.vmem [shape: f32[4,54], index: 1, kind: input, shape index: {}]
  %s2 = inlined_call_operand.vmem [shape: f32[4,1], index: 2, kind: input, shape index: {}]
  %s3 = inlined_call_operand.vmem [shape: f32[4,1], index: 3, kind: input, shape index: {}]
  %s4 = inlined_call_operand.vmem [shape: f32[4,1], index: 4, kind: input, shape index: {}]
  %s5 = inlined_call_operand.vmem [shape: f32[8,4], index: 5, kind: input, shape index: {}]
  %s6 = inlined_call_operand.vmem [shape: f32[8,1], index: 6, kind: input, shape index: {}]
  %s7 = inlined_call_operand.vmem [shape: f32[8,1], index: 7, kind: input, shape index: {}]
  %s8 = inlined_call_operand.vmem [shape: f32[8,1], index: 8, kind: input, shape index: {}]
  %s9 = inlined_call_operand.vmem [shape: f32[8,8192], index: 9, kind: output, shape index: {}]
  %s10 = sld [smem:[#allocation0]]
  $region92: #{_block_forward.1} parent=0
    _
  %s12 = ssub.s32 1, %s10
  %s13 = scalar_select 0, %s12, %s10
  $region1: #{_block_forward.1} parent=0
    #allocation2 [shape = 'u8[229376]{0}', space=vmem, size = 0x38000, scoped, tag = 'input window, operand 0']
    loop: start=0, step=1, limit=18
    $region2: #{_block_forward.1} parent=1 // loop_pre_header
      _
    $region3: #{_block_forward.1} parent=1 // loop_header
      %s15 = sphi 0, %s19
      %p16 = scmp.ge.s32.totalorder %s15, 18
      %s25 = sphi 0, %s27
      %s28 = sphi 0, %s25
      %s29 = sphi 0, %s28
      %s45 = sphi 0, %s29
      %s49 = sphi 0, %s49
      %s51 = sphi 0, %s49
      %s52 = sphi 0, %s51
      %s66 = sphi 0, %s52
      %s70 = sphi 0, %s70
      %s72 = sphi 0, %s70
      %s73 = sphi 0, %s72
      %s87 = sphi 0, %s73
      %s91 = sphi 0, %s91
      %s93 = sphi 0, %s91
      %s94 = sphi 0, %s93
      %s108 = sphi 0, %s94
      %s112 = sphi 0, %s112
      %s114 = sphi 0, %s112
      %s115 = sphi 0, %s114
      %s129 = sphi 0, %s115
      %s133 = sphi 0, %s133
      %s135 = sphi 0, %s133
      %s136 = sphi 0, %s135
      %s150 = sphi 0, %s136
      %s154 = sphi 0, %s154
      %s156 = sphi 0, %s154
      %s157 = sphi 0, %s156
      %s171 = sphi 0, %s157
      %s175 = sphi 0, %s175
      %s177 = sphi 0, %s175
      %s178 = sphi 0, %s177
      %s192 = sphi 0, %s178
      %s196 = sphi 0, %s196
      %s198 = sphi 0, %s196
      %s199 = sphi 0, %s198
      %s213 = sphi 0, %s199
      %s219 = sphi 0, %s221
      %s222 = sphi 0, %s219
      %s223 = sphi 0, %s222
      %s239 = sphi 0, %s223
    $region4: #{_block_forward.1} parent=1 // loop_header_branch
      %18 = sbr.rel (%p16) target = $region8
    $region5: #{_block_forward.1} parent=1 // loop_body
      %s20 = ssub.s32 %s15, 1
      %s21 = ssub.s32 %s15, 2
      %s22 = sadd.s32 %s15, 1
      %s23 = ssub.s32 %s15, %s22
      %p24 = scmp.eq.s32.totalorder %s23, 0
      %s26 = sadd.s32 %s25, 1
      %s27 = scalar_select %p24, %s25, %s26
      %p30 = pneg %p24
      %p31 = scmp.eq.s32.totalorder %s15, 15
      %p32 = por %p30, %p31
      %p33 = scmp.ne.s32.totalorder %s25, %s28
      %p34 = scmp.eq.s32.totalorder %s15, 0
      %p35 = por %p33, %p34
      %p36 = scmp.ne.s32.totalorder %s25, %s28
      %p37 = scmp.eq.s32.totalorder %s20, 15
      %p38 = por %p36, %p37
      %p39 = scmp.ne.s32.totalorder %s28, %s29
      %p40 = scmp.eq.s32.totalorder %s20, 0
      %p41 = por %p39, %p40
      %p42 = scmp.ne.s32.totalorder %s28, %s29
      %p43 = scmp.eq.s32.totalorder %s21, 15
      %p44 = por %p42, %p43
      %p46 = scmp.ne.s32.totalorder %s29, %s45
      %p47 = scmp.eq.s32.totalorder %s21, 0
      %p48 = por %p46, %p47
      %s50 = sadd.s32 %s49, 1
      %p53 = scmp.eq.s32.totalorder %s15, 15
      %p54 = scmp.ne.s32.totalorder %s49, %s51
      %p55 = scmp.eq.s32.totalorder %s15, 0
      %p56 = por %p54, %p55
      %p57 = scmp.ne.s32.totalorder %s49, %s51
      %p58 = scmp.eq.s32.totalorder %s20, 15
      %p59 = por %p57, %p58
      %p60 = scmp.ne.s32.totalorder %s51, %s52
      %p61 = scmp.eq.s32.totalorder %s20, 0
      %p62 = por %p60, %p61
      %p63 = scmp.ne.s32.totalorder %s51, %s52
      %p64 = scmp.eq.s32.totalorder %s21, 15
      %p65 = por %p63, %p64
      %p67 = scmp.ne.s32.totalorder %s52, %s66
      %p68 = scmp.eq.s32.totalorder %s21, 0
      %p69 = por %p67, %p68
      %s71 = sadd.s32 %s70, 1
      %p74 = scmp.eq.s32.totalorder %s15, 15
      %p75 = scmp.ne.s32.totalorder %s70, %s72
      %p76 = scmp.eq.s32.totalorder %s15, 0
      %p77 = por %p75, %p76
      %p78 = scmp.ne.s32.totalorder %s70, %s72
      %p79 = scmp.eq.s32.totalorder %s20, 15
      %p80 = por %p78, %p79
      %p81 = scmp.ne.s32.totalorder %s72, %s73
      %p82 = scmp.eq.s32.totalorder %s20, 0
      %p83 = por %p81, %p82
      %p84 = scmp.ne.s32.totalorder %s72, %s73
      %p85 = scmp.eq.s32.totalorder %s21, 15
      %p86 = por %p84, %p85
      %p88 = scmp.ne.s32.totalorder %s73, %s87
      %p89 = scmp.eq.s32.totalorder %s21, 0
      %p90 = por %p88, %p89
      %s92 = sadd.s32 %s91, 1
      %p95 = scmp.eq.s32.totalorder %s15, 15
      %p96 = scmp.ne.s32.totalorder %s91, %s93
      %p97 = scmp.eq.s32.totalorder %s15, 0
      %p98 = por %p96, %p97
      %p99 = scmp.ne.s32.totalorder %s91, %s93
      %p100 = scmp.eq.s32.totalorder %s20, 15
      %p101 = por %p99, %p100
      %p102 = scmp.ne.s32.totalorder %s93, %s94
      %p103 = scmp.eq.s32.totalorder %s20, 0
      %p104 = por %p102, %p103
      %p105 = scmp.ne.s32.totalorder %s93, %s94
      %p106 = scmp.eq.s32.totalorder %s21, 15
      %p107 = por %p105, %p106
      %p109 = scmp.ne.s32.totalorder %s94, %s108
      %p110 = scmp.eq.s32.totalorder %s21, 0
      %p111 = por %p109, %p110
      %s113 = sadd.s32 %s112, 1
      %p116 = scmp.eq.s32.totalorder %s15, 15
      %p117 = scmp.ne.s32.totalorder %s112, %s114
      %p118 = scmp.eq.s32.totalorder %s15, 0
      %p119 = por %p117, %p118
      %p120 = scmp.ne.s32.totalorder %s112, %s114
      %p121 = scmp.eq.s32.totalorder %s20, 15
      %p122 = por %p120, %p121
      %p123 = scmp.ne.s32.totalorder %s114, %s115
      %p124 = scmp.eq.s32.totalorder %s20, 0
      %p125 = por %p123, %p124
      %p126 = scmp.ne.s32.totalorder %s114, %s115
      %p127 = scmp.eq.s32.totalorder %s21, 15
      %p128 = por %p126, %p127
      %p130 = scmp.ne.s32.totalorder %s115, %s129
      %p131 = scmp.eq.s32.totalorder %s21, 0
      %p132 = por %p130, %p131
      %s134 = sadd.s32 %s133, 1
      %p137 = scmp.eq.s32.totalorder %s15, 15
      %p138 = scmp.ne.s32.totalorder %s133, %s135
      %p139 = scmp.eq.s32.totalorder %s15, 0
      %p140 = por %p138, %p139
      %p141 = scmp.ne.s32.totalorder %s133, %s135
      %p142 = scmp.eq.s32.totalorder %s20, 15
      %p143 = por %p141, %p142
      %p144 = scmp.ne.s32.totalorder %s135, %s136
      %p145 = scmp.eq.s32.totalorder %s20, 0
      %p146 = por %p144, %p145
      %p147 = scmp.ne.s32.totalorder %s135, %s136
      %p148 = scmp.eq.s32.totalorder %s21, 15
      %p149 = por %p147, %p148
      %p151 = scmp.ne.s32.totalorder %s136, %s150
      %p152 = scmp.eq.s32.totalorder %s21, 0
      %p153 = por %p151, %p152
      %s155 = sadd.s32 %s154, 1
      %p158 = scmp.eq.s32.totalorder %s15, 15
      %p159 = scmp.ne.s32.totalorder %s154, %s156
      %p160 = scmp.eq.s32.totalorder %s15, 0
      %p161 = por %p159, %p160
      %p162 = scmp.ne.s32.totalorder %s154, %s156
      %p163 = scmp.eq.s32.totalorder %s20, 15
      %p164 = por %p162, %p163
      %p165 = scmp.ne.s32.totalorder %s156, %s157
      %p166 = scmp.eq.s32.totalorder %s20, 0
      %p167 = por %p165, %p166
      %p168 = scmp.ne.s32.totalorder %s156, %s157
      %p169 = scmp.eq.s32.totalorder %s21, 15
      %p170 = por %p168, %p169
      %p172 = scmp.ne.s32.totalorder %s157, %s171
      %p173 = scmp.eq.s32.totalorder %s21, 0
      %p174 = por %p172, %p173
      %s176 = sadd.s32 %s175, 1
      %p179 = scmp.eq.s32.totalorder %s15, 15
      %p180 = scmp.ne.s32.totalorder %s175, %s177
      %p181 = scmp.eq.s32.totalorder %s15, 0
      %p182 = por %p180, %p181
      %p183 = scmp.ne.s32.totalorder %s175, %s177
      %p184 = scmp.eq.s32.totalorder %s20, 15
      %p185 = por %p183, %p184
      %p186 = scmp.ne.s32.totalorder %s177, %s178
      %p187 = scmp.eq.s32.totalorder %s20, 0
      %p188 = por %p186, %p187
      %p189 = scmp.ne.s32.totalorder %s177, %s178
      %p190 = scmp.eq.s32.totalorder %s21, 15
      %p191 = por %p189, %p190
      %p193 = scmp.ne.s32.totalorder %s178, %s192
      %p194 = scmp.eq.s32.totalorder %s21, 0
      %p195 = por %p193, %p194
      %s197 = sadd.s32 %s196, 1
      %p200 = scmp.eq.s32.totalorder %s15, 15
      %p201 = scmp.ne.s32.totalorder %s196, %s198
      %p202 = scmp.eq.s32.totalorder %s15, 0
      %p203 = por %p201, %p202
      %p204 = scmp.ne.s32.totalorder %s196, %s198
      %p205 = scmp.eq.s32.totalorder %s20, 15
      %p206 = por %p204, %p205
      %p207 = scmp.ne.s32.totalorder %s198, %s199
      %p208 = scmp.eq.s32.totalorder %s20, 0
      %p209 = por %p207, %p208
      %p210 = scmp.ne.s32.totalorder %s198, %s199
      %p211 = scmp.eq.s32.totalorder %s21, 15
      %p212 = por %p210, %p211
      %p214 = scmp.ne.s32.totalorder %s199, %s213
      %p215 = scmp.eq.s32.totalorder %s21, 0
      %p216 = por %p214, %p215
      %s217 = ssub.s32 %s15, %s22
      %p218 = scmp.eq.s32.totalorder %s217, 0
      %s220 = sadd.s32 %s219, 1
      %s221 = scalar_select %p218, %s219, %s220
      %p224 = pneg %p218
      %p225 = scmp.eq.s32.totalorder %s15, 15
      %p226 = por %p224, %p225
      %p227 = scmp.ne.s32.totalorder %s219, %s222
      %p228 = scmp.eq.s32.totalorder %s15, 0
      %p229 = por %p227, %p228
      %p230 = scmp.ne.s32.totalorder %s219, %s222
      %p231 = scmp.eq.s32.totalorder %s20, 15
      %p232 = por %p230, %p231
      %p233 = scmp.ne.s32.totalorder %s222, %s223
      %p234 = scmp.eq.s32.totalorder %s20, 0
      %p235 = por %p233, %p234
      %p236 = scmp.ne.s32.totalorder %s222, %s223
      %p237 = scmp.eq.s32.totalorder %s21, 15
      %p238 = por %p236, %p237
      %p240 = scmp.ne.s32.totalorder %s223, %s239
      %p241 = scmp.eq.s32.totalorder %s21, 0
      %p242 = por %p240, %p241
      %p243 = scmp.le.s32.totalorder 1, %s15
      %p244 = scmp.lt.s32.totalorder %s15, 17
      %p245 = pnand %p243, %p244
      %p246 = pneg %p245
      // Predicated region
      $region9: #{_block_forward.1} parent=5 // pred_check
        _
      $region10: #{_block_forward.1} parent=5 // pred_check_branch
        %248 = sbr.rel (%p245) target = $region12
      $region11: #{_block_forward.1} parent=5 // pred_region
        %s249 = ssub.s32 %s15, 1
        // Predicated region
        $region13: #{_block_forward.1} parent=11 // pred_check
          %p250 = pneg %p62
        $region14: #{_block_forward.1} parent=11 // pred_check_branch
          %252 = sbr.rel (%p250) target = $region16
        $region15: #{_block_forward.1} parent=11 // pred_region
          _
        $region16: #{_block_forward.1} parent=11 // pred_fallthru
          _
        // Predicated region
        $region17: #{_block_forward.1} parent=11 // pred_check
          %p253 = pneg %p83
        $region18: #{_block_forward.1} parent=11 // pred_check_branch
          %255 = sbr.rel (%p253) target = $region20
        $region19: #{_block_forward.1} parent=11 // pred_region
          _
        $region20: #{_block_forward.1} parent=11 // pred_fallthru
          _
        // Predicated region
        $region21: #{_block_forward.1} parent=11 // pred_check
          %p256 = pneg %p104
        $region22: #{_block_forward.1} parent=11 // pred_check_branch
          %258 = sbr.rel (%p256) target = $region24
        $region23: #{_block_forward.1} parent=11 // pred_region
          _
        $region24: #{_block_forward.1} parent=11 // pred_fallthru
          _
        // Predicated region
        $region25: #{_block_forward.1} parent=11 // pred_check
          %p259 = pneg %p125
        $region26: #{_block_forward.1} parent=11 // pred_check_branch
          %261 = sbr.rel (%p259) target = $region28
        $region27: #{_block_forward.1} parent=11 // pred_region
          _
        $region28: #{_block_forward.1} parent=11 // pred_fallthru
          _
        // Predicated region
        $region29: #{_block_forward.1} parent=11 // pred_check
          %p262 = pneg %p146
        $region30: #{_block_forward.1} parent=11 // pred_check_branch
          %264 = sbr.rel (%p262) target = $region32
        $region31: #{_block_forward.1} parent=11 // pred_region
          _
        $region32: #{_block_forward.1} parent=11 // pred_fallthru
          _
        // Predicated region
        $region33: #{_block_forward.1} parent=11 // pred_check
          %p265 = pneg %p167
        $region34: #{_block_forward.1} parent=11 // pred_check_branch
          %267 = sbr.rel (%p265) target = $region36
        $region35: #{_block_forward.1} parent=11 // pred_region
          _
        $region36: #{_block_forward.1} parent=11 // pred_fallthru
          _
        // Predicated region
        $region37: #{_block_forward.1} parent=11 // pred_check
          %p268 = pneg %p188
        $region38: #{_block_forward.1} parent=11 // pred_check_branch
          %270 = sbr.rel (%p268) target = $region40
        $region39: #{_block_forward.1} parent=11 // pred_region
          _
        $region40: #{_block_forward.1} parent=11 // pred_fallthru
          _
        // Predicated region
        $region41: #{_block_forward.1} parent=11 // pred_check
          %p271 = pneg %p209
        $region42: #{_block_forward.1} parent=11 // pred_check_branch
          %273 = sbr.rel (%p271) target = $region44
        $region43: #{_block_forward.1} parent=11 // pred_region
          _
        $region44: #{_block_forward.1} parent=11 // pred_fallthru
          _
      $region12: #{_block_forward.1} parent=5 // pred_fallthru
        _
      %p274 = scmp.lt.s32.totalorder %s15, 16
      // Predicated region
      $region45: #{_block_forward.1} parent=5 // pred_check
        %p275 = pneg %p274
      $region46: #{_block_forward.1} parent=5 // pred_check_branch
        %277 = sbr.rel (%p275) target = $region48
      $region47: #{_block_forward.1} parent=5 // pred_region
        // Predicated region
        $region49: #{_block_forward.1} parent=47 // pred_check
          %p278 = pneg %p35
        $region50: #{_block_forward.1} parent=47 // pred_check_branch
          %280 = sbr.rel (%p278) target = $region52
        $region51: #{_block_forward.1} parent=47 // pred_region
          %s281 = sand.u32 %s25, 1
          %s282 = sand.u32 %s25, 1
          %s283 = smul.addr %s282, 224
          %s284 = scalar_lea.vmem [#allocation2], %s283
          %s285 = smul.u32 4, %s15
          %s286 = smul.addr %s285, 8
          %s287 = scalar_lea.vmem %s0, %s286
          // Predicated region
          $region53: #{_block_forward.1} parent=51 // pred_check
            _
          $region54: #{_block_forward.1} parent=51 // pred_check_branch
            %289 = sbr.rel (0) target = $region56
          $region55: #{_block_forward.1} parent=51 // pred_region
            // Predicated region
            $region57: #{_block_forward.1} parent=55 // pred_check
              _
            $region58: #{_block_forward.1} parent=55 // pred_check_branch
              %291 = sbr.rel (0) target = $region60
            $region59: #{_block_forward.1} parent=55 // pred_region
              loop: start=0, step=1, limit=1
              $region61: #{_block_forward.1} parent=59 // loop_pre_header
                _
              $region62: #{_block_forward.1} parent=59 // loop_header
                %s293 = sphi 0, %s297
                %p294 = scmp.ge.s32.totalorder %s293, 1
                %s298 = sphi %s287, %s287
                %s299 = sphi %s284, %s284
              $region63: #{_block_forward.1} parent=59 // loop_header_branch
                %296 = sbr.rel (%p294) target = $region67
              $region64: #{_block_forward.1} parent=59 // loop_body
                %v300 = vld [vmem:[%s298] sm:$0xff]
                %301 = vst [vmem:[%s299] sm:$0xff] %v300
                %v302 = vld [vmem:[%s298 + $0x8] sm:$0xff]
                %303 = vst [vmem:[%s299 + $0x8] sm:$0xff] %v302
                %v304 = vld [vmem:[%s298 + $0x10] sm:$0xff]
                %305 = vst [vmem:[%s299 + $0x10] sm:$0xff] %v304
                %v306 = vld [vmem:[%s298 + $0x18] sm:$0xff]
                %307 = vst [vmem:[%s299 + $0x18] sm:$0xff] %v306
                %v308 = vld [vmem:[%s298 + $0x200] sm:$0xff]
                %309 = vst [vmem:[%s299 + $0x20] sm:$0xff] %v308
                %v310 = vld [vmem:[%s298 + $0x208] sm:$0xff]
                %311 = vst [vmem:[%s299 + $0x28] sm:$0xff] %v310
                %v312 = vld [vmem:[%s298 + $0x210] sm:$0xff]
                %313 = vst [vmem:[%s299 + $0x30] sm:$0xff] %v312
                %v314 = vld [vmem:[%s298 + $0x218] sm:$0xff]
                %315 = vst [vmem:[%s299 + $0x38] sm:$0xff] %v314
                %v316 = vld [vmem:[%s298 + $0x400] sm:$0xff]
                %317 = vst [vmem:[%s299 + $0x40] sm:$0xff] %v316
                %v318 = vld [vmem:[%s298 + $0x408] sm:$0xff]
                %319 = vst [vmem:[%s299 + $0x48] sm:$0xff] %v318
                %v320 = vld [vmem:[%s298 + $0x410] sm:$0xff]
                %321 = vst [vmem:[%s299 + $0x50] sm:$0xff] %v320
                %v322 = vld [vmem:[%s298 + $0x418] sm:$0xff]
                %323 = vst [vmem:[%s299 + $0x58] sm:$0xff] %v322
                %v324 = vld [vmem:[%s298 + $0x600] sm:$0xff]
                %325 = vst [vmem:[%s299 + $0x60] sm:$0xff] %v324
                %v326 = vld [vmem:[%s298 + $0x608] sm:$0xff]
                %327 = vst [vmem:[%s299 + $0x68] sm:$0xff] %v326
                %v328 = vld [vmem:[%s298 + $0x610] sm:$0xff]
                %329 = vst [vmem:[%s299 + $0x70] sm:$0xff] %v328
                %v330 = vld [vmem:[%s298 + $0x618] sm:$0xff]
                %331 = vst [vmem:[%s299 + $0x78] sm:$0xff] %v330
                %v332 = vld [vmem:[%s298 + $0x800] sm:$0xff]
                %333 = vst [vmem:[%s299 + $0x80] sm:$0xff] %v332
                %v334 = vld [vmem:[%s298 + $0x808] sm:$0xff]
                %335 = vst [vmem:[%s299 + $0x88] sm:$0xff] %v334
                %v336 = vld [vmem:[%s298 + $0x810] sm:$0xff]
                %337 = vst [vmem:[%s299 + $0x90] sm:$0xff] %v336
                %v338 = vld [vmem:[%s298 + $0x818] sm:$0xff]
                %339 = vst [vmem:[%s299 + $0x98] sm:$0xff] %v338
                %v340 = vld [vmem:[%s298 + $0xa00] sm:$0xff]
                %341 = vst [vmem:[%s299 + $0xa0] sm:$0xff] %v340
                %v342 = vld [vmem:[%s298 + $0xa08] sm:$0xff]
                %343 = vst [vmem:[%s299 + $0xa8] sm:$0xff] %v342
                %v344 = vld [vmem:[%s298 + $0xa10] sm:$0xff]
                %345 = vst [vmem:[%s299 + $0xb0] sm:$0xff] %v344
                %v346 = vld [vmem:[%s298 + $0xa18] sm:$0xff]
                %347 = vst [vmem:[%s299 + $0xb8] sm:$0xff] %v346
                %v348 = vld [vmem:[%s298 + $0xc00] sm:$0xff]
                %349 = vst [vmem:[%s299 + $0xc0] sm:$0xff] %v348
                %v350 = vld [vmem:[%s298 + $0xc08] sm:$0xff]
                %351 = vst [vmem:[%s299 + $0xc8] sm:$0xff] %v350
                %v352 = vld [vmem:[%s298 + $0xc10] sm:$0xff]
                %353 = vst [vmem:[%s299 + $0xd0] sm:$0xff] %v352
                %v354 = vld [vmem:[%s298 + $0xc18] sm:$0xff]
                %355 = vst [vmem:[%s299 + $0xd8] sm:$0xff] %v354
              $region65: #{_block_forward.1} parent=59 // loop_footer
                %s297 = sadd.s32 1, %s293
              $region66: #{_block_forward.1} parent=59 // loop_footer_branch
                %292 = sbr.rel target = $region62
              $region67: #{_block_forward.1} parent=59 // loop_exit
                _
            $region60: #{_block_forward.1} parent=55 // pred_fallthru
              _
            // Predicated region
            $region68: #{_block_forward.1} parent=55 // pred_check
              _
            $region69: #{_block_forward.1} parent=55 // pred_check_branch
              %357 = sbr.rel target = $region71
            $region70: #{_block_forward.1} parent=55 // pred_region
              _
            $region71: #{_block_forward.1} parent=55 // pred_fallthru
              _
          $region56: #{_block_forward.1} parent=51 // pred_fallthru
            _
          %358 = vnop
        $region52: #{_block_forward.1} parent=47 // pred_fallthru
          _
      $region48: #{_block_forward.1} parent=5 // pred_fallthru
        _
      %p359 = scmp.le.s32.totalorder 1, %s15
      %p360 = scmp.lt.s32.totalorder %s15, 17
      %p361 = pnand %p359, %p360
      %p362 = pneg %p361
      // Predicated region
      $region72: #{_block_forward.1} parent=5 // pred_check
        _
      $region73: #{_block_forward.1} parent=5 // pred_check_branch
        %364 = sbr.rel (%p361) target = $region75
      $region74: #{_block_forward.1} parent=5 // pred_region
        %s365 = ssub.s32 %s15, 1
        %s366 = sand.u32 %s28, 1
        %s367 = sand.u32 %s28, 1
        %s368 = smul.addr %s367, 224
        %s369 = scalar_lea.vmem [#allocation2], %s368
        // Predicated region
        $region76: #{_block_forward.1} parent=74 // pred_check
          %p370 = pneg %p41
        $region77: #{_block_forward.1} parent=74 // pred_check_branch
          %372 = sbr.rel (%p370) target = $region79
        $region78: #{_block_forward.1} parent=74 // pred_region
          _
        $region79: #{_block_forward.1} parent=74 // pred_fallthru
          _
        %s373 = sand.u32 %s28, 1
        %s374 = sand.u32 %s28, 1
        %s375 = smul.addr %s374, 224
        %s376 = scalar_lea.vmem [#allocation2], %s375
        %p377 = pneg %p41
        %p378 = pneg %p38
        %p379 = pneg %p62
        %p380 = pneg %p59
        %p381 = pneg %p83
        %p382 = pneg %p80
        %p383 = pneg %p104
        %p384 = pneg %p101
        %p385 = pneg %p125
        %p386 = pneg %p122
        %p387 = pneg %p146
        %p388 = pneg %p143
        %p389 = pneg %p167
        %p390 = pneg %p164
        %p391 = pneg %p188
        %p392 = pneg %p185
        %p393 = pneg %p209
        %p394 = pneg %p206
        %p395 = pneg %p235
        %p396 = pneg %p232
        %s397 = smul.u32 4, %s20
        %p398 = scmp.lt.s32.totalorder %s397, 63
        %s399 = scalar_select %p398, %s397, 63
        %s400 = smul.addr %s399, 8
        %s401 = scalar_lea.vmem %s9, %s400
        %s402 = smul.u32 4, %s20
        %s403 = smul.u32 4, %s20
        %p404 = scmp.lt.s32.totalorder %s403, 63
        %s405 = scalar_select %p404, %s403, 63
        %s406 = smul.addr %s405, 8
        %s407 = scalar_lea.vmem %s9, %s406
        %s408 = smul.u32 4, %s20
        %v409 = vld [vmem:[%s369] sm:$0xff]
        %v410 = vld [vmem:[%s369 + $0x8] sm:$0xff]
        %v411 = vld [vmem:[%s369 + $0x10] sm:$0xff]
        %v412 = vld [vmem:[%s369 + $0x18] sm:$0xff]
        %v413 = vld [vmem:[%s369 + $0x20] sm:$0xff]
        %v414 = vld [vmem:[%s369 + $0x28] sm:$0xff]
        %v415 = vld [vmem:[%s369 + $0x30] sm:$0xff]
        %v416 = vld [vmem:[%s369 + $0x38] sm:$0xff]
        %v417 = vld [vmem:[%s369 + $0x40] sm:$0xff]
        %v418 = vld [vmem:[%s369 + $0x48] sm:$0xff]
        %v419 = vld [vmem:[%s369 + $0x50] sm:$0xff]
        %v420 = vld [vmem:[%s369 + $0x58] sm:$0xff]
        %v421 = vld [vmem:[%s369 + $0x60] sm:$0xff]
        %v422 = vld [vmem:[%s369 + $0x68] sm:$0xff]
        %v423 = vld [vmem:[%s369 + $0x70] sm:$0xff]
        %v424 = vld [vmem:[%s369 + $0x78] sm:$0xff]
        %v425 = vld [vmem:[%s369 + $0x80] sm:$0xff]
        %v426 = vld [vmem:[%s369 + $0x88] sm:$0xff]
        %v427 = vld [vmem:[%s369 + $0x90] sm:$0xff]
        %v428 = vld [vmem:[%s369 + $0x98] sm:$0xff]
        %v429 = vld [vmem:[%s369 + $0xa0] sm:$0xff]
        %v430 = vld [vmem:[%s369 + $0xa8] sm:$0xff]
        %v431 = vld [vmem:[%s369 + $0xb0] sm:$0xff]
        %v432 = vld [vmem:[%s369 + $0xb8] sm:$0xff]
        %v433 = vld [vmem:[%s369 + $0xc0] sm:$0x3f]
        %v434 = vld [vmem:[%s369 + $0xc8] sm:$0x3f]
        %v435 = vld [vmem:[%s369 + $0xd0] sm:$0x3f]
        %v436 = vld [vmem:[%s369 + $0xd8] sm:$0x3f]
        %v437 = vld [vmem:[%s1] sm:$0xf]
        %v438 = vld [vmem:[%s2] sm:$0xf]
        %440 = vset.pattern.permute.xlu0 0
        %441 = vperm.xlu0 %440, %v438
        %v442 = vpop.permute.xlu0 %441
        %vm444 = vcmask 441344
        %v446 = vsel %vm444, %v437, 0
        %vm448 = vcmask 1045504
        %v450 = vsel %vm448, %v433, 0
        %v453 = vsel %vm448, %v434, 0
        %v456 = vsel %vm448, %v435, 0
        %v459 = vsel %vm448, %v436, 0
        %461 = vmatpush.msra.mxu0 0.0
        %462 = vmatpush.msra.mxu0 0.0
        %463 = vmatpush.msra.mxu0 0.0
        %464 = vmatpush.msra.mxu0 0.0
        %465 = vmatpush.msra.mxu0 0.0
        %466 = vmatpush.msra.mxu0 0.0
        %467 = vmatpush.msra.mxu0 0.0
        %468 = vmatpush.msra.mxu0 0.0
        %469 = vmatpush.msra.mxu0 0.0
        %470 = vmatpush.msra.mxu0 %v450
        %471 = vmatpush.msra.mxu0 %v429
        %472 = vmatpush.msra.mxu0 %v425
        %473 = vmatpush.msra.mxu0 %v421
        %474 = vmatpush.msra.mxu0 %v417
        %475 = vmatpush.msra.mxu0 %v413
        %476 = vmatpush.msra.mxu0 %v409
        %477 = vmatmul.f32.gmra.mxu0 %v446
        %v478 = vpop.f32.mrf.mxu0
        %v479 = vadd.f32 %v442, %v478
        %480 = vdwg.mxu0
        %481 = vmatpush.msra.mxu0 0.0
        %482 = vmatpush.msra.mxu0 0.0
        %483 = vmatpush.msra.mxu0 0.0
        %484 = vmatpush.msra.mxu0 0.0
        %485 = vmatpush.msra.mxu0 0.0
        %486 = vmatpush.msra.mxu0 0.0
        %487 = vmatpush.msra.mxu0 0.0
        %488 = vmatpush.msra.mxu0 0.0
        %489 = vmatpush.msra.mxu0 0.0
        %490 = vmatpush.msra.mxu0 %v453
        %491 = vmatpush.msra.mxu0 %v430
        %492 = vmatpush.msra.mxu0 %v426
        %493 = vmatpush.msra.mxu0 %v422
        %494 = vmatpush.msra.mxu0 %v418
        %495 = vmatpush.msra.mxu0 %v414
        %496 = vmatpush.msra.mxu0 %v410
        %497 = vmatmul.f32.gmra.mxu0 %v446
        %v498 = vpop.f32.mrf.mxu0
        %v499 = vadd.f32 %v442, %v498
        %500 = vdwg.mxu0
        %501 = vmatpush.msra.mxu0 0.0
        %502 = vmatpush.msra.mxu0 0.0
        %503 = vmatpush.msra.mxu0 0.0
        %504 = vmatpush.msra.mxu0 0.0
        %505 = vmatpush.msra.mxu0 0.0
        %506 = vmatpush.msra.mxu0 0.0
        %507 = vmatpush.msra.mxu0 0.0
        %508 = vmatpush.msra.mxu0 0.0
        %509 = vmatpush.msra.mxu0 0.0
        %510 = vmatpush.msra.mxu0 %v456
        %511 = vmatpush.msra.mxu0 %v431
        %512 = vmatpush.msra.mxu0 %v427
        %513 = vmatpush.msra.mxu0 %v423
        %514 = vmatpush.msra.mxu0 %v419
        %515 = vmatpush.msra.mxu0 %v415
        %516 = vmatpush.msra.mxu0 %v411
        %517 = vmatmul.f32.gmra.mxu0 %v446
        %v518 = vpop.f32.mrf.mxu0
        %v519 = vadd.f32 %v442, %v518
        %520 = vdwg.mxu0
        %521 = vmatpush.msra.mxu0 0.0
        %522 = vmatpush.msra.mxu0 0.0
        %523 = vmatpush.msra.mxu0 0.0
        %524 = vmatpush.msra.mxu0 0.0
        %525 = vmatpush.msra.mxu0 0.0
        %526 = vmatpush.msra.mxu0 0.0
        %527 = vmatpush.msra.mxu0 0.0
        %528 = vmatpush.msra.mxu0 0.0
        %529 = vmatpush.msra.mxu0 0.0
        %530 = vmatpush.msra.mxu0 %v459
        %531 = vmatpush.msra.mxu0 %v432
        %532 = vmatpush.msra.mxu0 %v428
        %533 = vmatpush.msra.mxu0 %v424
        %534 = vmatpush.msra.mxu0 %v420
        %535 = vmatpush.msra.mxu0 %v416
        %536 = vmatpush.msra.mxu0 %v412
        %537 = vmatmul.f32.gmra.mxu0 %v446
        %v538 = vpop.f32.mrf.mxu0
        %v539 = vadd.f32 %v442, %v538
        %540 = vdwg.mxu0
        %v541 = vmul.f32 %v479, 0.5
        %v542 = vmul.f32 %v499, 0.5
        %v543 = vmul.f32 %v519, 0.5
        %v544 = vmul.f32 %v539, 0.5
        %v545 = vmul.f32 %v479, 0.70710677
        %v546 = vmul.f32 %v499, 0.70710677
        %v547 = vmul.f32 %v519, 0.70710677
        %v548 = vmul.f32 %v539, 0.70710677
        %v549 = vand.u32 2147483647, %v545
        %v550 = vand.u32 2147483647, %v546
        %v551 = vand.u32 2147483647, %v547
        %v552 = vand.u32 2147483647, %v548
        %v553 = vmul.f32 %v549, 0.3275911
        %v554 = vmul.f32 %v550, 0.3275911
        %v555 = vmul.f32 %v551, 0.3275911
        %v556 = vmul.f32 %v552, 0.3275911
        %v557 = vadd.f32 %v553, 1.0
        %v558 = vadd.f32 %v554, 1.0
        %v559 = vadd.f32 %v555, 1.0
        %v560 = vadd.f32 %v556, 1.0
        %v561 = vrcp.pop %v557
        %v562 = vmul.f32 %v557, %v561
        %v563 = vsub.f32 1.0, %v562
        %v564 = vmul.f32 %v561, %v563
        %v565 = vadd.f32 %v561, %v564
        %vm566 = vweird.f32 %v557
        %vm567 = vweird.f32 %v561
        %vm568 = vmor %vm566, %vm567
        %v569 = vsel %vm568, %v561, %v565
        %v570 = vand.u32 2147483647, %v557
        %vm571 = vcmp.eq.f32.partialorder %v570, 8.507059e+37
        %v572 = vand.u32 %v557, 2147483648
        %v573 = vor.u32 1.1754944e-38, %v572
        %v574 = vsel %vm571, %v573, %v569
        %v575 = vmul.f32 1.0, %v574
        %v576 = vrcp.pop %v558
        %v577 = vmul.f32 %v558, %v576
        %v578 = vsub.f32 1.0, %v577
        %v579 = vmul.f32 %v576, %v578
        %v580 = vadd.f32 %v576, %v579
        %vm581 = vweird.f32 %v558
        %vm582 = vweird.f32 %v576
        %vm583 = vmor %vm581, %vm582
        %v584 = vsel %vm583, %v576, %v580
        %v585 = vand.u32 2147483647, %v558
        %vm586 = vcmp.eq.f32.partialorder %v585, 8.507059e+37
        %v587 = vand.u32 %v558, 2147483648
        %v588 = vor.u32 1.1754944e-38, %v587
        %v589 = vsel %vm586, %v588, %v584
        %v590 = vmul.f32 1.0, %v589
        %v591 = vrcp.pop %v559
        %v592 = vmul.f32 %v559, %v591
        %v593 = vsub.f32 1.0, %v592
        %v594 = vmul.f32 %v591, %v593
        %v595 = vadd.f32 %v591, %v594
        %vm596 = vweird.f32 %v559
        %vm597 = vweird.f32 %v591
        %vm598 = vmor %vm596, %vm597
        %v599 = vsel %vm598, %v591, %v595
        %v600 = vand.u32 2147483647, %v559
        %vm601 = vcmp.eq.f32.partialorder %v600, 8.507059e+37
        %v602 = vand.u32 %v559, 2147483648
        %v603 = vor.u32 1.1754944e-38, %v602
        %v604 = vsel %vm601, %v603, %v599
        %v605 = vmul.f32 1.0, %v604
        %v606 = vrcp.pop %v560
        %v607 = vmul.f32 %v560, %v606
        %v608 = vsub.f32 1.0, %v607
        %v609 = vmul.f32 %v606, %v608
        %v610 = vadd.f32 %v606, %v609
        %vm611 = vweird.f32 %v560
        %vm612 = vweird.f32 %v606
        %vm613 = vmor %vm611, %vm612
        %v614 = vsel %vm613, %v606, %v610
        %v615 = vand.u32 2147483647, %v560
        %vm616 = vcmp.eq.f32.partialorder %v615, 8.507059e+37
        %v617 = vand.u32 %v560, 2147483648
        %v618 = vor.u32 1.1754944e-38, %v617
        %v619 = vsel %vm616, %v618, %v614
        %v620 = vmul.f32 1.0, %v619
        %v621 = vmul.f32 %v575, 1.0614054
        %v622 = vmul.f32 %v590, 1.0614054
        %v623 = vmul.f32 %v605, 1.0614054
        %v624 = vmul.f32 %v620, 1.0614054
        %v625 = vadd.f32 %v621, -1.4531521
        %v626 = vadd.f32 %v622, -1.4531521
        %v627 = vadd.f32 %v623, -1.4531521
        %v628 = vadd.f32 %v624, -1.4531521
        %v629 = vmul.f32 %v625, %v575
        %v630 = vmul.f32 %v626, %v590
        %v631 = vmul.f32 %v627, %v605
        %v632 = vmul.f32 %v628, %v620
        %v633 = vadd.f32 %v629, 1.4214138
        %v634 = vadd.f32 %v630, 1.4214138
        %v635 = vadd.f32 %v631, 1.4214138
        %v636 = vadd.f32 %v632, 1.4214138
        %v637 = vmul.f32 %v633, %v575
        %v638 = vmul.f32 %v634, %v590
        %v639 = vmul.f32 %v635, %v605
        %v640 = vmul.f32 %v636, %v620
        %v641 = vadd.f32 %v637, -0.28449672
        %v642 = vadd.f32 %v638, -0.28449672
        %v643 = vadd.f32 %v639, -0.28449672
        %v644 = vadd.f32 %v640, -0.28449672
        %v645 = vmul.f32 %v641, %v575
        %v646 = vmul.f32 %v642, %v590
        %v647 = vmul.f32 %v643, %v605
        %v648 = vmul.f32 %v644, %v620
        %v649 = vadd.f32 %v645, 0.2548296
        %v650 = vadd.f32 %v646, 0.2548296
        %v651 = vadd.f32 %v647, 0.2548296
        %v652 = vadd.f32 %v648, 0.2548296
        %v653 = vmul.f32 %v649, %v575
        %v654 = vmul.f32 %v650, %v590
        %v655 = vmul.f32 %v651, %v605
        %v656 = vmul.f32 %v652, %v620
        %v657 = vsub.f32 0.0, %v549
        %v658 = vsub.f32 0.0, %v550
        %v659 = vsub.f32 0.0, %v551
        %v660 = vsub.f32 0.0, %v552
        %v661 = vmul.f32 %v657, %v549
        %v662 = vmul.f32 %v658, %v550
        %v663 = vmul.f32 %v659, %v551
        %v664 = vmul.f32 %v660, %v552
        %v665 = vmul.f32 %v661, 1.442695
        %v666 = vpow.pop %v665
        %v667 = vmul.f32 %v662, 1.442695
        %v668 = vpow.pop %v667
        %v669 = vmul.f32 %v663, 1.442695
        %v670 = vpow.pop %v669
        %v671 = vmul.f32 %v664, 1.442695
        %v672 = vpow.pop %v671
        %v673 = vmul.f32 %v653, %v666
        %v674 = vmul.f32 %v654, %v668
        %v675 = vmul.f32 %v655, %v670
        %v676 = vmul.f32 %v656, %v672
        %v677 = vsub.f32 1.0, %v673
        %v678 = vsub.f32 1.0, %v674
        %v679 = vsub.f32 1.0, %v675
        %v680 = vsub.f32 1.0, %v676
        %vm681 = vcmp.ge.f32.partialorder %v545, 0.0
        %vm682 = vcmp.ge.f32.partialorder %v546, 0.0
        %vm683 = vcmp.ge.f32.partialorder %v547, 0.0
        %vm684 = vcmp.ge.f32.partialorder %v548, 0.0
        %v685 = vsub.f32 0.0, %v677
        %v686 = vsub.f32 0.0, %v678
        %v687 = vsub.f32 0.0, %v679
        %v688 = vsub.f32 0.0, %v680
        %v689 = vsel %vm681, %v677, %v685
        %v690 = vsel %vm682, %v678, %v686
        %v691 = vsel %vm683, %v679, %v687
        %v692 = vsel %vm684, %v680, %v688
        %v693 = vadd.f32 %v689, 1.0
        %v694 = vadd.f32 %v690, 1.0
        %v695 = vadd.f32 %v691, 1.0
        %v696 = vadd.f32 %v692, 1.0
        %v697 = vmul.f32 %v541, %v693
        %v698 = vmul.f32 %v542, %v694
        %v699 = vmul.f32 %v543, %v695
        %v700 = vmul.f32 %v544, %v696
        %v701 = vld [vmem:[%s3] sm:$0xf]
        %v702 = vld [vmem:[%s4] sm:$0xf]
        %vm703 = vcmask 1043456
        %v704 = vsel %vm703, %v697, 0.0
        %v705 = vrot.slane %v704, 4
        %v706 = vadd.f32 %v704, %v705
        %v707 = vrot.slane %v706, 2
        %v708 = vadd.f32 %v706, %v707
        %v709 = vrot.slane %v708, 1
        %v710 = vadd.f32 %v708, %v709
        %v711 = vsel %vm703, %v698, 0.0
        %v712 = vrot.slane %v711, 4
        %v713 = vadd.f32 %v711, %v712
        %v714 = vrot.slane %v713, 2
        %v715 = vadd.f32 %v713, %v714
        %v716 = vrot.slane %v715, 1
        %v717 = vadd.f32 %v715, %v716
        %v718 = vsel %vm703, %v699, 0.0
        %v719 = vrot.slane %v718, 4
        %v720 = vadd.f32 %v718, %v719
        %v721 = vrot.slane %v720, 2
        %v722 = vadd.f32 %v720, %v721
        %v723 = vrot.slane %v722, 1
        %v724 = vadd.f32 %v722, %v723
        %v725 = vsel %vm703, %v700, 0.0
        %v726 = vrot.slane %v725, 4
        %v727 = vadd.f32 %v725, %v726
        %v728 = vrot.slane %v727, 2
        %v729 = vadd.f32 %v727, %v728
        %v730 = vrot.slane %v729, 1
        %v731 = vadd.f32 %v729, %v730
        %v732 = vrcp.pop 4.0
        %v733 = vmul.f32 4.0, %v732
        %v734 = vsub.f32 1.0, %v733
        %v735 = vmul.f32 %v732, %v734
        %v736 = vadd.f32 %v732, %v735
        %vm737 = vweird.f32 %v732
        %v738 = vsel %vm737, %v732, %v736
        %v739 = vmul.f32 %v710, %v738
        %v740 = vmul.f32 %v717, %v738
        %v741 = vmul.f32 %v724, %v738
        %v742 = vmul.f32 %v731, %v738
        %v743 = vsub.f32 %v697, %v739
        %v744 = vsub.f32 %v698, %v740
        %v745 = vsub.f32 %v699, %v741
        %v746 = vsub.f32 %v700, %v742
        %v747 = vmul.f32 %v743, %v743
        %v748 = vmul.f32 %v744, %v744
        %v749 = vmul.f32 %v745, %v745
        %v750 = vmul.f32 %v746, %v746
        %v751 = vsel %vm703, %v747, 0.0
        %v752 = vrot.slane %v751, 4
        %v753 = vadd.f32 %v751, %v752
        %v754 = vrot.slane %v753, 2
        %v755 = vadd.f32 %v753, %v754
        %v756 = vrot.slane %v755, 1
        %v757 = vadd.f32 %v755, %v756
        %v758 = vsel %vm703, %v748, 0.0
        %v759 = vrot.slane %v758, 4
        %v760 = vadd.f32 %v758, %v759
        %v761 = vrot.slane %v760, 2
        %v762 = vadd.f32 %v760, %v761
        %v763 = vrot.slane %v762, 1
        %v764 = vadd.f32 %v762, %v763
        %v765 = vsel %vm703, %v749, 0.0
        %v766 = vrot.slane %v765, 4
        %v767 = vadd.f32 %v765, %v766
        %v768 = vrot.slane %v767, 2
        %v769 = vadd.f32 %v767, %v768
        %v770 = vrot.slane %v769, 1
        %v771 = vadd.f32 %v769, %v770
        %v772 = vsel %vm703, %v750, 0.0
        %v773 = vrot.slane %v772, 4
        %v774 = vadd.f32 %v772, %v773
        %v775 = vrot.slane %v774, 2
        %v776 = vadd.f32 %v774, %v775
        %v777 = vrot.slane %v776, 1
        %v778 = vadd.f32 %v776, %v777
        %v779 = vmul.f32 %v757, %v738
        %v780 = vmul.f32 %v764, %v738
        %v781 = vmul.f32 %v771, %v738
        %v782 = vmul.f32 %v778, %v738
        %v783 = vadd.f32 %v779, 1e-05
        %v784 = vadd.f32 %v780, 1e-05
        %v785 = vadd.f32 %v781, 1e-05
        %v786 = vadd.f32 %v782, 1e-05
        %v787 = vrsqrt.pop %v783
        %v788 = vmul.f32 %v787, %v783
        %v789 = vmul.f32 %v788, %v787
        %v790 = vmul.f32 0.5, %v789
        %v791 = vsub.f32 1.5, %v790
        %v792 = vmul.f32 %v787, %v791
        %vm793 = vweird.f32 %v783
        %vm794 = vweird.f32 %v787
        %vm795 = vmor %vm793, %vm794
        %v796 = vsel %vm795, %v787, %v792
        %v797 = vrsqrt.pop %v784
        %v798 = vmul.f32 %v797, %v784
        %v799 = vmul.f32 %v798, %v797
        %v800 = vmul.f32 0.5, %v799
        %v801 = vsub.f32 1.5, %v800
        %v802 = vmul.f32 %v797, %v801
        %vm803 = vweird.f32 %v784
        %vm804 = vweird.f32 %v797
        %vm805 = vmor %vm803, %vm804
        %v806 = vsel %vm805, %v797, %v802
        %v807 = vrsqrt.pop %v785
        %v808 = vmul.f32 %v807, %v785
        %v809 = vmul.f32 %v808, %v807
        %v810 = vmul.f32 0.5, %v809
        %v811 = vsub.f32 1.5, %v810
        %v812 = vmul.f32 %v807, %v811
        %vm813 = vweird.f32 %v785
        %vm814 = vweird.f32 %v807
        %vm815 = vmor %vm813, %vm814
        %v816 = vsel %vm815, %v807, %v812
        %v817 = vrsqrt.pop %v786
        %v818 = vmul.f32 %v817, %v786
        %v819 = vmul.f32 %v818, %v817
        %v820 = vmul.f32 0.5, %v819
        %v821 = vsub.f32 1.5, %v820
        %v822 = vmul.f32 %v817, %v821
        %vm823 = vweird.f32 %v786
        %vm824 = vweird.f32 %v817
        %vm825 = vmor %vm823, %vm824
        %v826 = vsel %vm825, %v817, %v822
        %v827 = vmul.f32 %v743, %v796
        %v828 = vmul.f32 %v744, %v806
        %v829 = vmul.f32 %v745, %v816
        %v830 = vmul.f32 %v746, %v826
        %832 = vset.pattern.permute.xlu0 0
        %833 = vperm.xlu0 %832, %v701
        %v834 = vpop.permute.xlu0 %833
        %v836 = vmul.f32 %v827, %v834
        %v837 = vmul.f32 %v828, %v834
        %v838 = vmul.f32 %v829, %v834
        %v839 = vmul.f32 %v830, %v834
        %841 = vset.pattern.permute.xlu0 0
        %842 = vperm.xlu0 %841, %v702
        %v843 = vpop.permute.xlu0 %842
        %v845 = vadd.f32 %v836, %v843
        %v846 = vadd.f32 %v837, %v843
        %v847 = vadd.f32 %v838, %v843
        %v848 = vadd.f32 %v839, %v843
        %v849 = vld [vmem:[%s5] sm:$0xff]
        %v850 = vld [vmem:[%s6] sm:$0xff]
        %852 = vset.pattern.permute.xlu0 0
        %853 = vperm.xlu0 %852, %v850
        %v854 = vpop.permute.xlu0 %853
        %vm856 = vcmask 31744
        %v858 = vsel %vm856, %v849, 0
        %v861 = vsel %vm703, %v845, 0
        %v864 = vsel %vm703, %v846, 0
        %v867 = vsel %vm703, %v847, 0
        %v870 = vsel %vm703, %v848, 0
        %872 = vmatpush.msra.mxu0 0.0
        %873 = vmatpush.msra.mxu0 0.0
        %874 = vmatpush.msra.mxu0 0.0
        %875 = vmatpush.msra.mxu0 0.0
        %876 = vmatpush.msra.mxu0 0.0
        %877 = vmatpush.msra.mxu0 0.0
        %878 = vmatpush.msra.mxu0 0.0
        %879 = vmatpush.msra.mxu0 0.0
        %880 = vmatpush.msra.mxu0 0.0
        %881 = vmatpush.msra.mxu0 0.0
        %882 = vmatpush.msra.mxu0 0.0
        %883 = vmatpush.msra.mxu0 0.0
        %884 = vmatpush.msra.mxu0 0.0
        %885 = vmatpush.msra.mxu0 0.0
        %886 = vmatpush.msra.mxu0 0.0
        %887 = vmatpush.msra.mxu0 %v861
        %888 = vmatmul.f32.gmra.mxu0 %v858
        %v889 = vpop.f32.mrf.mxu0
        %v890 = vadd.f32 %v854, %v889
        %891 = vdwg.mxu0
        %892 = vmatpush.msra.mxu0 0.0
        %893 = vmatpush.msra.mxu0 0.0
        %894 = vmatpush.msra.mxu0 0.0
        %895 = vmatpush.msra.mxu0 0.0
        %896 = vmatpush.msra.mxu0 0.0
        %897 = vmatpush.msra.mxu0 0.0
        %898 = vmatpush.msra.mxu0 0.0
        %899 = vmatpush.msra.mxu0 0.0
        %900 = vmatpush.msra.mxu0 0.0
        %901 = vmatpush.msra.mxu0 0.0
        %902 = vmatpush.msra.mxu0 0.0
        %903 = vmatpush.msra.mxu0 0.0
        %904 = vmatpush.msra.mxu0 0.0
        %905 = vmatpush.msra.mxu0 0.0
        %906 = vmatpush.msra.mxu0 0.0
        %907 = vmatpush.msra.mxu0 %v864
        %908 = vmatmul.f32.gmra.mxu0 %v858
        %v909 = vpop.f32.mrf.mxu0
        %v910 = vadd.f32 %v854, %v909
        %911 = vdwg.mxu0
        %912 = vmatpush.msra.mxu0 0.0
        %913 = vmatpush.msra.mxu0 0.0
        %914 = vmatpush.msra.mxu0 0.0
        %915 = vmatpush.msra.mxu0 0.0
        %916 = vmatpush.msra.mxu0 0.0
        %917 = vmatpush.msra.mxu0 0.0
        %918 = vmatpush.msra.mxu0 0.0
        %919 = vmatpush.msra.mxu0 0.0
        %920 = vmatpush.msra.mxu0 0.0
        %921 = vmatpush.msra.mxu0 0.0
        %922 = vmatpush.msra.mxu0 0.0
        %923 = vmatpush.msra.mxu0 0.0
        %924 = vmatpush.msra.mxu0 0.0
        %925 = vmatpush.msra.mxu0 0.0
        %926 = vmatpush.msra.mxu0 0.0
        %927 = vmatpush.msra.mxu0 %v867
        %928 = vmatmul.f32.gmra.mxu0 %v858
        %v929 = vpop.f32.mrf.mxu0
        %v930 = vadd.f32 %v854, %v929
        %931 = vdwg.mxu0
        %932 = vmatpush.msra.mxu0 0.0
        %933 = vmatpush.msra.mxu0 0.0
        %934 = vmatpush.msra.mxu0 0.0
        %935 = vmatpush.msra.mxu0 0.0
        %936 = vmatpush.msra.mxu0 0.0
        %937 = vmatpush.msra.mxu0 0.0
        %938 = vmatpush.msra.mxu0 0.0
        %939 = vmatpush.msra.mxu0 0.0
        %940 = vmatpush.msra.mxu0 0.0
        %941 = vmatpush.msra.mxu0 0.0
        %942 = vmatpush.msra.mxu0 0.0
        %943 = vmatpush.msra.mxu0 0.0
        %944 = vmatpush.msra.mxu0 0.0
        %945 = vmatpush.msra.mxu0 0.0
        %946 = vmatpush.msra.mxu0 0.0
        %947 = vmatpush.msra.mxu0 %v870
        %948 = vmatmul.f32.gmra.mxu0 %v858
        %v949 = vpop.f32.mrf.mxu0
        %v950 = vadd.f32 %v854, %v949
        %951 = vdwg.mxu0
        %v952 = vmul.f32 %v890, 0.5
        %v953 = vmul.f32 %v910, 0.5
        %v954 = vmul.f32 %v930, 0.5
        %v955 = vmul.f32 %v950, 0.5
        %v956 = vmul.f32 %v890, 0.70710677
        %v957 = vmul.f32 %v910, 0.70710677
        %v958 = vmul.f32 %v930, 0.70710677
        %v959 = vmul.f32 %v950, 0.70710677
        %v960 = vand.u32 2147483647, %v956
        %v961 = vand.u32 2147483647, %v957
        %v962 = vand.u32 2147483647, %v958
        %v963 = vand.u32 2147483647, %v959
        %v964 = vmul.f32 %v960, 0.3275911
        %v965 = vmul.f32 %v961, 0.3275911
        %v966 = vmul.f32 %v962, 0.3275911
        %v967 = vmul.f32 %v963, 0.3275911
        %v968 = vadd.f32 %v964, 1.0
        %v969 = vadd.f32 %v965, 1.0
        %v970 = vadd.f32 %v966, 1.0
        %v971 = vadd.f32 %v967, 1.0
        %v972 = vrcp.pop %v968
        %v973 = vmul.f32 %v968, %v972
        %v974 = vsub.f32 1.0, %v973
        %v975 = vmul.f32 %v972, %v974
        %v976 = vadd.f32 %v972, %v975
        %vm977 = vweird.f32 %v968
        %vm978 = vweird.f32 %v972
        %vm979 = vmor %vm977, %vm978
        %v980 = vsel %vm979, %v972, %v976
        %v981 = vand.u32 2147483647, %v968
        %vm982 = vcmp.eq.f32.partialorder %v981, 8.507059e+37
        %v983 = vand.u32 %v968, 2147483648
        %v984 = vor.u32 1.1754944e-38, %v983
        %v985 = vsel %vm982, %v984, %v980
        %v986 = vmul.f32 1.0, %v985
        %v987 = vrcp.pop %v969
        %v988 = vmul.f32 %v969, %v987
        %v989 = vsub.f32 1.0, %v988
        %v990 = vmul.f32 %v987, %v989
        %v991 = vadd.f32 %v987, %v990
        %vm992 = vweird.f32 %v969
        %vm993 = vweird.f32 %v987
        %vm994 = vmor %vm992, %vm993
        %v995 = vsel %vm994, %v987, %v991
        %v996 = vand.u32 2147483647, %v969
        %vm997 = vcmp.eq.f32.partialorder %v996, 8.507059e+37
        %v998 = vand.u32 %v969, 2147483648
        %v999 = vor.u32 1.1754944e-38, %v998
        %v1000 = vsel %vm997, %v999, %v995
        %v1001 = vmul.f32 1.0, %v1000
        %v1002 = vrcp.pop %v970
        %v1003 = vmul.f32 %v970, %v1002
        %v1004 = vsub.f32 1.0, %v1003
        %v1005 = vmul.f32 %v1002, %v1004
        %v1006 = vadd.f32 %v1002, %v1005
        %vm1007 = vweird.f32 %v970
        %vm1008 = vweird.f32 %v1002
        %vm1009 = vmor %vm1007, %vm1008
        %v1010 = vsel %vm1009, %v1002, %v1006
        %v1011 = vand.u32 2147483647, %v970
        %vm1012 = vcmp.eq.f32.partialorder %v1011, 8.507059e+37
        %v1013 = vand.u32 %v970, 2147483648
        %v1014 = vor.u32 1.1754944e-38, %v1013
        %v1015 = vsel %vm1012, %v1014, %v1010
        %v1016 = vmul.f32 1.0, %v1015
        %v1017 = vrcp.pop %v971
        %v1018 = vmul.f32 %v971, %v1017
        %v1019 = vsub.f32 1.0, %v1018
        %v1020 = vmul.f32 %v1017, %v1019
        %v1021 = vadd.f32 %v1017, %v1020
        %vm1022 = vweird.f32 %v971
        %vm1023 = vweird.f32 %v1017
        %vm1024 = vmor %vm1022, %vm1023
        %v1025 = vsel %vm1024, %v1017, %v1021
        %v1026 = vand.u32 2147483647, %v971
        %vm1027 = vcmp.eq.f32.partialorder %v1026, 8.507059e+37
        %v1028 = vand.u32 %v971, 2147483648
        %v1029 = vor.u32 1.1754944e-38, %v1028
        %v1030 = vsel %vm1027, %v1029, %v1025
        %v1031 = vmul.f32 1.0, %v1030
        %v1032 = vmul.f32 %v986, 1.0614054
        %v1033 = vmul.f32 %v1001, 1.0614054
        %v1034 = vmul.f32 %v1016, 1.0614054
        %v1035 = vmul.f32 %v1031, 1.0614054
        %v1036 = vadd.f32 %v1032, -1.4531521
        %v1037 = vadd.f32 %v1033, -1.4531521
        %v1038 = vadd.f32 %v1034, -1.4531521
        %v1039 = vadd.f32 %v1035, -1.4531521
        %v1040 = vmul.f32 %v1036, %v986
        %v1041 = vmul.f32 %v1037, %v1001
        %v1042 = vmul.f32 %v1038, %v1016
        %v1043 = vmul.f32 %v1039, %v1031
        %v1044 = vadd.f32 %v1040, 1.4214138
        %v1045 = vadd.f32 %v1041, 1.4214138
        %v1046 = vadd.f32 %v1042, 1.4214138
        %v1047 = vadd.f32 %v1043, 1.4214138
        %v1048 = vmul.f32 %v1044, %v986
        %v1049 = vmul.f32 %v1045, %v1001
        %v1050 = vmul.f32 %v1046, %v1016
        %v1051 = vmul.f32 %v1047, %v1031
        %v1052 = vadd.f32 %v1048, -0.28449672
        %v1053 = vadd.f32 %v1049, -0.28449672
        %v1054 = vadd.f32 %v1050, -0.28449672
        %v1055 = vadd.f32 %v1051, -0.28449672
        %v1056 = vmul.f32 %v1052, %v986
        %v1057 = vmul.f32 %v1053, %v1001
        %v1058 = vmul.f32 %v1054, %v1016
        %v1059 = vmul.f32 %v1055, %v1031
        %v1060 = vadd.f32 %v1056, 0.2548296
        %v1061 = vadd.f32 %v1057, 0.2548296
        %v1062 = vadd.f32 %v1058, 0.2548296
        %v1063 = vadd.f32 %v1059, 0.2548296
        %v1064 = vmul.f32 %v1060, %v986
        %v1065 = vmul.f32 %v1061, %v1001
        %v1066 = vmul.f32 %v1062, %v1016
        %v1067 = vmul.f32 %v1063, %v1031
        %v1068 = vsub.f32 0.0, %v960
        %v1069 = vsub.f32 0.0, %v961
        %v1070 = vsub.f32 0.0, %v962
        %v1071 = vsub.f32 0.0, %v963
        %v1072 = vmul.f32 %v1068, %v960
        %v1073 = vmul.f32 %v1069, %v961
        %v1074 = vmul.f32 %v1070, %v962
        %v1075 = vmul.f32 %v1071, %v963
        %v1076 = vmul.f32 %v1072, 1.442695
        %v1077 = vpow.pop %v1076
        %v1078 = vmul.f32 %v1073, 1.442695
        %v1079 = vpow.pop %v1078
        %v1080 = vmul.f32 %v1074, 1.442695
        %v1081 = vpow.pop %v1080
        %v1082 = vmul.f32 %v1075, 1.442695
        %v1083 = vpow.pop %v1082
        %v1084 = vmul.f32 %v1064, %v1077
        %v1085 = vmul.f32 %v1065, %v1079
        %v1086 = vmul.f32 %v1066, %v1081
        %v1087 = vmul.f32 %v1067, %v1083
        %v1088 = vsub.f32 1.0, %v1084
        %v1089 = vsub.f32 1.0, %v1085
        %v1090 = vsub.f32 1.0, %v1086
        %v1091 = vsub.f32 1.0, %v1087
        %vm1092 = vcmp.ge.f32.partialorder %v956, 0.0
        %vm1093 = vcmp.ge.f32.partialorder %v957, 0.0
        %vm1094 = vcmp.ge.f32.partialorder %v958, 0.0
        %vm1095 = vcmp.ge.f32.partialorder %v959, 0.0
        %v1096 = vsub.f32 0.0, %v1088
        %v1097 = vsub.f32 0.0, %v1089
        %v1098 = vsub.f32 0.0, %v1090
        %v1099 = vsub.f32 0.0, %v1091
        %v1100 = vsel %vm1092, %v1088, %v1096
        %v1101 = vsel %vm1093, %v1089, %v1097
        %v1102 = vsel %vm1094, %v1090, %v1098
        %v1103 = vsel %vm1095, %v1091, %v1099
        %v1104 = vadd.f32 %v1100, 1.0
        %v1105 = vadd.f32 %v1101, 1.0
        %v1106 = vadd.f32 %v1102, 1.0
        %v1107 = vadd.f32 %v1103, 1.0
        %v1108 = vmul.f32 %v952, %v1104
        %v1109 = vmul.f32 %v953, %v1105
        %v1110 = vmul.f32 %v954, %v1106
        %v1111 = vmul.f32 %v955, %v1107
        %v1112 = vld [vmem:[%s7] sm:$0xff]
        %v1113 = vld [vmem:[%s8] sm:$0xff]
        %v1114 = vrot.slane %v1108, 4
        %v1115 = vadd.f32 %v1108, %v1114
        %v1116 = vrot.slane %v1115, 2
        %v1117 = vadd.f32 %v1115, %v1116
        %v1118 = vrot.slane %v1117, 1
        %v1119 = vadd.f32 %v1117, %v1118
        %v1120 = vrot.slane %v1109, 4
        %v1121 = vadd.f32 %v1109, %v1120
        %v1122 = vrot.slane %v1121, 2
        %v1123 = vadd.f32 %v1121, %v1122
        %v1124 = vrot.slane %v1123, 1
        %v1125 = vadd.f32 %v1123, %v1124
        %v1126 = vrot.slane %v1110, 4
        %v1127 = vadd.f32 %v1110, %v1126
        %v1128 = vrot.slane %v1127, 2
        %v1129 = vadd.f32 %v1127, %v1128
        %v1130 = vrot.slane %v1129, 1
        %v1131 = vadd.f32 %v1129, %v1130
        %v1132 = vrot.slane %v1111, 4
        %v1133 = vadd.f32 %v1111, %v1132
        %v1134 = vrot.slane %v1133, 2
        %v1135 = vadd.f32 %v1133, %v1134
        %v1136 = vrot.slane %v1135, 1
        %v1137 = vadd.f32 %v1135, %v1136
        %v1138 = vrcp.pop 8.0
        %v1139 = vmul.f32 8.0, %v1138
        %v1140 = vsub.f32 1.0, %v1139
        %v1141 = vmul.f32 %v1138, %v1140
        %v1142 = vadd.f32 %v1138, %v1141
        %vm1143 = vweird.f32 %v1138
        %v1144 = vsel %vm1143, %v1138, %v1142
        %v1145 = vmul.f32 %v1119, %v1144
        %v1146 = vmul.f32 %v1125, %v1144
        %v1147 = vmul.f32 %v1131, %v1144
        %v1148 = vmul.f32 %v1137, %v1144
        %v1149 = vsub.f32 %v1108, %v1145
        %v1150 = vsub.f32 %v1109, %v1146
        %v1151 = vsub.f32 %v1110, %v1147
        %v1152 = vsub.f32 %v1111, %v1148
        %v1153 = vmul.f32 %v1149, %v1149
        %v1154 = vmul.f32 %v1150, %v1150
        %v1155 = vmul.f32 %v1151, %v1151
        %v1156 = vmul.f32 %v1152, %v1152
        %v1157 = vrot.slane %v1153, 4
        %v1158 = vadd.f32 %v1153, %v1157
        %v1159 = vrot.slane %v1158, 2
        %v1160 = vadd.f32 %v1158, %v1159
        %v1161 = vrot.slane %v1160, 1
        %v1162 = vadd.f32 %v1160, %v1161
        %v1163 = vrot.slane %v1154, 4
        %v1164 = vadd.f32 %v1154, %v1163
        %v1165 = vrot.slane %v1164, 2
        %v1166 = vadd.f32 %v1164, %v1165
        %v1167 = vrot.slane %v1166, 1
        %v1168 = vadd.f32 %v1166, %v1167
        %v1169 = vrot.slane %v1155, 4
        %v1170 = vadd.f32 %v1155, %v1169
        %v1171 = vrot.slane %v1170, 2
        %v1172 = vadd.f32 %v1170, %v1171
        %v1173 = vrot.slane %v1172, 1
        %v1174 = vadd.f32 %v1172, %v1173
        %v1175 = vrot.slane %v1156, 4
        %v1176 = vadd.f32 %v1156, %v1175
        %v1177 = vrot.slane %v1176, 2
        %v1178 = vadd.f32 %v1176, %v1177
        %v1179 = vrot.slane %v1178, 1
        %v1180 = vadd.f32 %v1178, %v1179
        %v1181 = vmul.f32 %v1162, %v1144
        %v1182 = vmul.f32 %v1168, %v1144
        %v1183 = vmul.f32 %v1174, %v1144
        %v1184 = vmul.f32 %v1180, %v1144
        %v1185 = vadd.f32 %v1181, 1e-05
        %v1186 = vadd.f32 %v1182, 1e-05
        %v1187 = vadd.f32 %v1183, 1e-05
        %v1188 = vadd.f32 %v1184, 1e-05
        %v1189 = vrsqrt.pop %v1185
        %v1190 = vmul.f32 %v1189, %v1185
        %v1191 = vmul.f32 %v1190, %v1189
        %v1192 = vmul.f32 0.5, %v1191
        %v1193 = vsub.f32 1.5, %v1192
        %v1194 = vmul.f32 %v1189, %v1193
        %vm1195 = vweird.f32 %v1185
        %vm1196 = vweird.f32 %v1189
        %vm1197 = vmor %vm1195, %vm1196
        %v1198 = vsel %vm1197, %v1189, %v1194
        %v1199 = vrsqrt.pop %v1186
        %v1200 = vmul.f32 %v1199, %v1186
        %v1201 = vmul.f32 %v1200, %v1199
        %v1202 = vmul.f32 0.5, %v1201
        %v1203 = vsub.f32 1.5, %v1202
        %v1204 = vmul.f32 %v1199, %v1203
        %vm1205 = vweird.f32 %v1186
        %vm1206 = vweird.f32 %v1199
        %vm1207 = vmor %vm1205, %vm1206
        %v1208 = vsel %vm1207, %v1199, %v1204
        %v1209 = vrsqrt.pop %v1187
        %v1210 = vmul.f32 %v1209, %v1187
        %v1211 = vmul.f32 %v1210, %v1209
        %v1212 = vmul.f32 0.5, %v1211
        %v1213 = vsub.f32 1.5, %v1212
        %v1214 = vmul.f32 %v1209, %v1213
        %vm1215 = vweird.f32 %v1187
        %vm1216 = vweird.f32 %v1209
        %vm1217 = vmor %vm1215, %vm1216
        %v1218 = vsel %vm1217, %v1209, %v1214
        %v1219 = vrsqrt.pop %v1188
        %v1220 = vmul.f32 %v1219, %v1188
        %v1221 = vmul.f32 %v1220, %v1219
        %v1222 = vmul.f32 0.5, %v1221
        %v1223 = vsub.f32 1.5, %v1222
        %v1224 = vmul.f32 %v1219, %v1223
        %vm1225 = vweird.f32 %v1188
        %vm1226 = vweird.f32 %v1219
        %vm1227 = vmor %vm1225, %vm1226
        %v1228 = vsel %vm1227, %v1219, %v1224
        %v1229 = vmul.f32 %v1149, %v1198
        %v1230 = vmul.f32 %v1150, %v1208
        %v1231 = vmul.f32 %v1151, %v1218
        %v1232 = vmul.f32 %v1152, %v1228
        %1234 = vset.pattern.permute.xlu0 0
        %1235 = vperm.xlu0 %1234, %v1112
        %v1236 = vpop.permute.xlu0 %1235
        %v1238 = vmul.f32 %v1229, %v1236
        %v1239 = vmul.f32 %v1230, %v1236
        %v1240 = vmul.f32 %v1231, %v1236
        %v1241 = vmul.f32 %v1232, %v1236
        %1243 = vset.pattern.permute.xlu0 0
        %1244 = vperm.xlu0 %1243, %v1113
        %v1245 = vpop.permute.xlu0 %1244
        %v1247 = vadd.f32 %v1238, %v1245
        %v1248 = vadd.f32 %v1239, %v1245
        %v1249 = vadd.f32 %v1240, %v1245
        %v1250 = vadd.f32 %v1241, %v1245
        %1251 = vst [vmem:[%s407] sm:$0xff] %v1247
        %1252 = vst [vmem:[%s407 + $0x8] sm:$0xff] %v1248
        %1253 = vst [vmem:[%s407 + $0x10] sm:$0xff] %v1249
        %1254 = vst [vmem:[%s407 + $0x18] sm:$0xff] %v1250
        %s1255 = smul.u32 4, %s20
        %p1256 = scmp.lt.s32.totalorder %s1255, 63
        %s1257 = scalar_select %p1256, %s1255, 63
        %s1258 = smul.addr %s1257, 8
        %s1259 = scalar_lea.vmem %s9, %s1258
        // Predicated region
        $region80: #{_block_forward.1} parent=74 // pred_check
          %p1260 = pneg %p232
        $region81: #{_block_forward.1} parent=74 // pred_check_branch
          %1262 = sbr.rel (%p1260) target = $region83
        $region82: #{_block_forward.1} parent=74 // pred_region
          %s1263 = smul.u32 4, %s20
        $region83: #{_block_forward.1} parent=74 // pred_fallthru
          _
      $region75: #{_block_forward.1} parent=5 // pred_fallthru
        _
      %p1264 = scmp.le.s32.totalorder 2, %s15
      // Predicated region
      $region84: #{_block_forward.1} parent=5 // pred_check
        %p1265 = pneg %p1264
      $region85: #{_block_forward.1} parent=5 // pred_check_branch
        %1267 = sbr.rel (%p1265) target = $region87
      $region86: #{_block_forward.1} parent=5 // pred_region
        %s1268 = ssub.s32 %s15, 2
        // Predicated region
        $region88: #{_block_forward.1} parent=86 // pred_check
          %p1269 = pneg %p238
        $region89: #{_block_forward.1} parent=86 // pred_check_branch
          %1271 = sbr.rel (%p1269) target = $region91
        $region90: #{_block_forward.1} parent=86 // pred_region
          %s1272 = smul.u32 4, %s21
          %p1273 = scmp.lt.s32.totalorder %s1272, 63
          %s1274 = scalar_select %p1273, %s1272, 63
          %s1275 = smul.addr %s1274, 8
          %s1276 = scalar_lea.vmem %s9, %s1275
        $region91: #{_block_forward.1} parent=86 // pred_fallthru
          _
      $region87: #{_block_forward.1} parent=5 // pred_fallthru
        _
    $region6: #{_block_forward.1} parent=1 // loop_footer
      %s19 = sadd.s32 1, %s15
    $region7: #{_block_forward.1} parent=1 // loop_footer_branch
      %14 = sbr.rel target = $region3
    $region8: #{_block_forward.1} parent=1 // loop_exit
      _

</llo_original>
